<compile_context>
chip_gen: v7x
topology: tpu7x:2x2x1
jax: 0.10.0
libtpu: 0.0.40
codegen_flags: <defaults>
</compile_context>

<pallas_src>
import jax
import jax.numpy as jnp
from jax import lax
from jax.experimental import pallas as pl
from jax.experimental.pallas import tpu as pltpu

EPS = 1e-5  # nn.BatchNorm2d default eps


def _build_kernel(B, C, H, W, cols):
    BC, HW = B * C, H * W
    (col_w7, col_w3, col_cb, col_g, col_b, col_wbd, col_mn) = cols

    def kernel(xf_ref, p_ref, o_ref):
        xv = xf_ref[...]                      # (BC, lanes) padded, flattened x
        Pv = p_ref[...]                       # (BC, 128)   packed parameters

        # column index (c = lane % W) for the horizontal-boundary masks
        colmod = lax.broadcasted_iota(jnp.int32, (BC, HW), 1) % W

        lk = jnp.zeros((BC, HW), jnp.float32)   # 7x7 depthwise conv (no bias)
        dw = jnp.zeros((BC, HW), jnp.float32)   # 3x3 depthwise conv (no bias)
        res = None

        for dx in range(7):                     # per-dx mask hoisted out of dy
            d = dx - 3                          # column displacement
            use3 = 2 <= dx <= 4
            p7 = jnp.zeros((BC, HW), jnp.float32)
            p3 = jnp.zeros((BC, HW), jnp.float32)
            for dy in range(7):
                s = dy * W + dx                 # lane offset of this tap
                sl = xv[:, s:s + HW]            # shifted (BC, HW) view
                k7 = col_w7 + dy * 7 + dx
                p7 = p7 + Pv[:, k7:k7 + 1] * sl
                if use3 and 2 <= dy <= 4:
                    k3 = col_w3 + (dy - 2) * 3 + (dx - 2)
                    p3 = p3 + Pv[:, k3:k3 + 1] * sl
                if dy == 3 and dx == 3:
                    res = sl                    # identity shortcut = center tap
            if d == 0:                          # center column: mask is all-ones
                lk = lk + p7
                dw = dw + p3
            else:
                mask = ((colmod >= -d) & (colmod <= W - 1 - d)).astype(jnp.float32)
                lk = lk + mask * p7
                if use3:
                    dw = dw + mask * p3

        # pointwise 1x1 conv: one block-diagonal (BC,BC)x(BC,HW) MXU matmul,
        # default precision (well inside the 2e-3 tolerance at C=4).
        wbd = Pv[:, col_wbd:col_wbd + BC]
        pw = jnp.dot(wbd, dw, preferred_element_type=jnp.float32)

        # z = pointwise + large-kernel + residual + folded biases
        z = pw + lk + res + Pv[:, col_cb:col_cb + 1]

        # training-mode BatchNorm2d (biased stats over B,H,W per channel),
        # fused one-pass E[z^2]-mean^2 form.  mn = kron(ones(B,B), eye(C))/n
        # sums the same-channel rows; HIGHEST keeps these tiny dots ~f32 exact.
        mn = Pv[:, col_mn:col_mn + BC]
        zsum = jnp.dot(mn, z, preferred_element_type=jnp.float32,
                       precision=lax.Precision.HIGHEST)
        z2sum = jnp.dot(mn, z * z, preferred_element_type=jnp.float32,
                        precision=lax.Precision.HIGHEST)
        mean = jnp.sum(zsum, axis=1, keepdims=True)            # (BC, 1)
        var = jnp.sum(z2sum, axis=1, keepdims=True) - mean * mean
        inv = lax.rsqrt(var + EPS)
        scale = Pv[:, col_g:col_g + 1] * inv
        shift = Pv[:, col_b:col_b + 1] - mean * scale
        o_ref[...] = jnp.maximum(z * scale + shift, 0.0)        # ReLU

    return kernel


def combined_conv_block(x, params):
    """x: (B, C, H, W) float32.  Residual path implies C_in == C_out, stride 1."""
    w3, b3, wp, bp, w7, b7, gamma, beta = params
    B, C, H, W = x.shape
    BC, HW = B * C, H * W

    # ---- layout prep (pure data movement / parameter folding) ----
    # Vertical pad of 3 covers both the k=3/pad=1 and k=7/pad=3 convs; the
    # horizontal boundary is handled by lane masks inside the kernel so the
    # working layout stays lane-dense (H*W on the lane axis).
    xv = jnp.pad(x, ((0, 0), (0, 0), (3, 3), (0, 0)))
    flat = xv.reshape(BC, (H + 6) * W)
    needed = HW + 6 * W + 6                     # max tap-slice end
    lanes = pl.cdiv(needed, 128) * 128
    xf = jnp.pad(flat, ((0, 0), (3, lanes - flat.shape[1] - 3)))

    # Pack all per-channel parameters and the two small matrices into ONE
    # (BC, 128) table -> a single tiny parameter DMA instead of eight.
    wp2 = wp.reshape(C, C)
    cbias = wp2 @ b3 + bp + b7                  # fold wp@b3 + bp + b7
    col_w7, col_w3 = 0, 49
    col_cb, col_g, col_b = 58, 59, 60
    col_wbd = 61
    col_mn = col_wbd + BC
    ncols = pl.cdiv(max(128, col_mn + BC), 128) * 128
    assert col_mn + BC <= ncols

    def rep(v):                                 # (C, k) -> (BC, k), tile over B
        return jnp.tile(v.reshape(C, -1), (B, 1))

    P = jnp.zeros((BC, ncols), jnp.float32)
    P = P.at[:, col_w7:col_w7 + 49].set(rep(w7.reshape(C, 49)))
    P = P.at[:, col_w3:col_w3 + 9].set(rep(w3.reshape(C, 9)))
    P = P.at[:, col_cb:col_cb + 1].set(rep(cbias))
    P = P.at[:, col_g:col_g + 1].set(rep(gamma))
    P = P.at[:, col_b:col_b + 1].set(rep(beta))
    P = P.at[:, col_wbd:col_wbd + BC].set(jnp.kron(jnp.eye(B, dtype=jnp.float32), wp2))
    mn = jnp.kron(jnp.ones((B, B), jnp.float32), jnp.eye(C, dtype=jnp.float32))
    P = P.at[:, col_mn:col_mn + BC].set(mn / float(B * H * W))

    kernel = _build_kernel(
        B, C, H, W, (col_w7, col_w3, col_cb, col_g, col_b, col_wbd, col_mn))

    # Whole problem is a few tens of KB -> grid-less single-TC call.  For
    # production shapes, add a grid over (B, C) tiles with
    # dimension_semantics=("parallel", ...) to use both v7x cores and respect
    # its 64 MiB VMEM.
    out = pl.pallas_call(
        kernel,
        out_shape=jax.ShapeDtypeStruct((BC, HW), jnp.float32),
        in_specs=[pl.BlockSpec(memory_space=pltpu.MemorySpace.VMEM),
                  pl.BlockSpec(memory_space=pltpu.MemorySpace.VMEM)],
        out_specs=pl.BlockSpec(memory_space=pltpu.MemorySpace.VMEM),
    )(xf, P)
    return out.reshape(B, C, H, W)


def ref_forward(x, params):
    """Pure-JAX reference matching the PyTorch module in training mode."""
    w3, b3, wp, bp, w7, b7, gamma, beta = params
    B, C, H, W = x.shape
    dn = ("NCHW", "OIHW", "NCHW")
    dw = lax.conv_general_dilated(
        x, w3, (1, 1), ((1, 1), (1, 1)), dimension_numbers=dn,
        feature_group_count=C, precision=lax.Precision.HIGHEST)
    dw = dw + b3.reshape(1, C, 1, 1)
    pw = lax.conv_general_dilated(
        dw, wp, (1, 1), ((0, 0), (0, 0)), dimension_numbers=dn,
        precision=lax.Precision.HIGHEST)
    pw = pw + bp.reshape(1, C, 1, 1)
    lk = lax.conv_general_dilated(
        x, w7, (1, 1), ((3, 3), (3, 3)), dimension_numbers=dn,
        feature_group_count=C, precision=lax.Precision.HIGHEST)
    lk = lk + b7.reshape(1, C, 1, 1)
    z = pw + lk + x
    mean = jnp.mean(z, axis=(0, 2, 3), keepdims=True)
    var = jnp.mean((z - mean) ** 2, axis=(0, 2, 3), keepdims=True)
    y = (z - mean) * lax.rsqrt(var + EPS) * gamma.reshape(1, C, 1, 1) \
        + beta.reshape(1, C, 1, 1)
    return jnp.maximum(y, 0.0)


if __name__ == "__main__":
    B, C, H, W = 2, 4, 16, 16
    key = jax.random.PRNGKey(0)
    ks = jax.random.split(key, 9)
    x = jax.random.normal(ks[0], (B, C, H, W), jnp.float32)
    # parameter shapes follow the nn.Module __init__ (groups=C depthwise convs)
    w3 = 0.1 * jax.random.normal(ks[1], (C, 1, 3, 3), jnp.float32)
    b3 = 0.1 * jax.random.normal(ks[2], (C,), jnp.float32)
    wp = 0.1 * jax.random.normal(ks[3], (C, C, 1, 1), jnp.float32)
    bp = 0.1 * jax.random.normal(ks[4], (C,), jnp.float32)
    w7 = 0.1 * jax.random.normal(ks[5], (C, 1, 7, 7), jnp.float32)
    b7 = 0.1 * jax.random.normal(ks[6], (C,), jnp.float32)
    gamma = 1.0 + 0.1 * jax.random.normal(ks[7], (C,), jnp.float32)
    beta = 0.1 * jax.random.normal(ks[8], (C,), jnp.float32)
    params = (w3, b3, wp, bp, w7, b7, gamma, beta)

    out = jax.block_until_ready(combined_conv_block(x, params))
    ref = jax.block_until_ready(ref_forward(x, params))

    assert out.shape == (B, C, H, W) and out.dtype == jnp.float32
    err = float(jnp.max(jnp.abs(out - ref)))
    assert err < 2e-3, f"max abs err vs reference: {err}"
    print("KERNEL_OK")
</pallas_src>

<mosaic_0001>
module attributes {stable_mosaic.version = 11 : i64} {
  func.func @kernel(%arg0: memref<8x384xf32, #tpu.memory_space<vmem>>, %arg1: memref<8x128xf32, #tpu.memory_space<vmem>>, %arg2: memref<8x256xf32, #tpu.memory_space<vmem>>) attributes {dimension_semantics = [], scalar_prefetch = 0 : i64, scratch_operands = 0 : i64, tpu.core_type = #tpu.core_type<tc>} {
    %c0 = arith.constant 0 : index
    %c0_0 = arith.constant 0 : index
    %0 = vector.load %arg0[%c0, %c0_0] : memref<8x384xf32, #tpu.memory_space<vmem>>, vector<8x384xf32>
    %c0_1 = arith.constant 0 : index
    %c0_2 = arith.constant 0 : index
    %1 = vector.load %arg1[%c0_1, %c0_2] : memref<8x128xf32, #tpu.memory_space<vmem>>, vector<8x128xf32>
    %2 = tpu.iota {dimensions = array<i32: 1>} : vector<8x256xi32>
    %c16_i32 = arith.constant 16 : i32
    %c0_i32 = arith.constant 0 : i32
    %3 = arith.cmpi eq, %c16_i32, %c0_i32 : i32
    %c1_i32 = arith.constant 1 : i32
    %4 = arith.select %3, %c1_i32, %c16_i32 : i32
    %5 = vector.broadcast %4 : i32 to vector<8x256xi32>
    %6 = arith.remsi %2, %5 : vector<8x256xi32>
    %c0_i32_3 = arith.constant 0 : i32
    %7 = vector.broadcast %c0_i32_3 : i32 to vector<8x256xi32>
    %8 = arith.cmpi ne, %6, %7 : vector<8x256xi32>
    %c0_i32_4 = arith.constant 0 : i32
    %9 = vector.broadcast %c0_i32_4 : i32 to vector<8x256xi32>
    %10 = arith.cmpi slt, %6, %9 : vector<8x256xi32>
    %c0_i32_5 = arith.constant 0 : i32
    %11 = arith.cmpi slt, %4, %c0_i32_5 : i32
    %12 = vector.broadcast %11 : i1 to vector<8x256xi1>
    %13 = vector.broadcast %12 : vector<8x256xi1> to vector<8x256xi1>
    %14 = arith.xori %10, %13 : vector<8x256xi1>
    %15 = arith.andi %14, %8 : vector<8x256xi1>
    %16 = vector.broadcast %4 : i32 to vector<8x256xi32>
    %17 = arith.addi %6, %16 : vector<8x256xi32>
    %18 = arith.select %15, %17, %6 : vector<8x256xi1>, vector<8x256xi32>
    %cst = arith.constant 0.000000e+00 : f32
    %19 = vector.broadcast %cst : f32 to vector<8x256xf32>
    %cst_6 = arith.constant 0.000000e+00 : f32
    %20 = vector.broadcast %cst_6 : f32 to vector<8x256xf32>
    %cst_7 = arith.constant 0.000000e+00 : f32
    %21 = vector.broadcast %cst_7 : f32 to vector<8x256xf32>
    %22 = vector.extract_strided_slice %0 {offsets = [0, 0], sizes = [8, 256], strides = [1, 1]} : vector<8x384xf32> to vector<8x256xf32>
    %23 = vector.extract_strided_slice %1 {offsets = [0, 0], sizes = [8, 1], strides = [1, 1]} : vector<8x128xf32> to vector<8x1xf32>
    %24 = vector.broadcast %23 : vector<8x1xf32> to vector<8x256xf32>
    %25 = arith.mulf %24, %22 : vector<8x256xf32>
    %26 = arith.addf %21, %25 : vector<8x256xf32>
    %27 = vector.extract_strided_slice %0 {offsets = [0, 16], sizes = [8, 256], strides = [1, 1]} : vector<8x384xf32> to vector<8x256xf32>
    %28 = vector.extract_strided_slice %1 {offsets = [0, 7], sizes = [8, 1], strides = [1, 1]} : vector<8x128xf32> to vector<8x1xf32>
    %29 = vector.broadcast %28 : vector<8x1xf32> to vector<8x256xf32>
    %30 = arith.mulf %29, %27 : vector<8x256xf32>
    %31 = arith.addf %26, %30 : vector<8x256xf32>
    %32 = vector.extract_strided_slice %0 {offsets = [0, 32], sizes = [8, 256], strides = [1, 1]} : vector<8x384xf32> to vector<8x256xf32>
    %33 = vector.extract_strided_slice %1 {offsets = [0, 14], sizes = [8, 1], strides = [1, 1]} : vector<8x128xf32> to vector<8x1xf32>
    %34 = vector.broadcast %33 : vector<8x1xf32> to vector<8x256xf32>
    %35 = arith.mulf %34, %32 : vector<8x256xf32>
    %36 = arith.addf %31, %35 : vector<8x256xf32>
    %37 = vector.extract_strided_slice %0 {offsets = [0, 48], sizes = [8, 256], strides = [1, 1]} : vector<8x384xf32> to vector<8x256xf32>
    %38 = vector.extract_strided_slice %1 {offsets = [0, 21], sizes = [8, 1], strides = [1, 1]} : vector<8x128xf32> to vector<8x1xf32>
    %39 = vector.broadcast %38 : vector<8x1xf32> to vector<8x256xf32>
    %40 = arith.mulf %39, %37 : vector<8x256xf32>
    %41 = arith.addf %36, %40 : vector<8x256xf32>
    %42 = vector.extract_strided_slice %0 {offsets = [0, 64], sizes = [8, 256], strides = [1, 1]} : vector<8x384xf32> to vector<8x256xf32>
    %43 = vector.extract_strided_slice %1 {offsets = [0, 28], sizes = [8, 1], strides = [1, 1]} : vector<8x128xf32> to vector<8x1xf32>
    %44 = vector.broadcast %43 : vector<8x1xf32> to vector<8x256xf32>
    %45 = arith.mulf %44, %42 : vector<8x256xf32>
    %46 = arith.addf %41, %45 : vector<8x256xf32>
    %47 = vector.extract_strided_slice %0 {offsets = [0, 80], sizes = [8, 256], strides = [1, 1]} : vector<8x384xf32> to vector<8x256xf32>
    %48 = vector.extract_strided_slice %1 {offsets = [0, 35], sizes = [8, 1], strides = [1, 1]} : vector<8x128xf32> to vector<8x1xf32>
    %49 = vector.broadcast %48 : vector<8x1xf32> to vector<8x256xf32>
    %50 = arith.mulf %49, %47 : vector<8x256xf32>
    %51 = arith.addf %46, %50 : vector<8x256xf32>
    %52 = vector.extract_strided_slice %0 {offsets = [0, 96], sizes = [8, 256], strides = [1, 1]} : vector<8x384xf32> to vector<8x256xf32>
    %53 = vector.extract_strided_slice %1 {offsets = [0, 42], sizes = [8, 1], strides = [1, 1]} : vector<8x128xf32> to vector<8x1xf32>
    %54 = vector.broadcast %53 : vector<8x1xf32> to vector<8x256xf32>
    %55 = arith.mulf %54, %52 : vector<8x256xf32>
    %56 = arith.addf %51, %55 : vector<8x256xf32>
    %c3_i32 = arith.constant 3 : i32
    %57 = vector.broadcast %c3_i32 : i32 to vector<8x256xi32>
    %58 = arith.cmpi sge, %18, %57 : vector<8x256xi32>
    %c18_i32 = arith.constant 18 : i32
    %59 = vector.broadcast %c18_i32 : i32 to vector<8x256xi32>
    %60 = arith.cmpi sle, %18, %59 : vector<8x256xi32>
    %61 = arith.andi %58, %60 : vector<8x256xi1>
    %62 = arith.extui %61 : vector<8x256xi1> to vector<8x256xi32>
    %63 = arith.sitofp %62 : vector<8x256xi32> to vector<8x256xf32>
    %64 = arith.mulf %63, %56 : vector<8x256xf32>
    %65 = arith.addf %19, %64 : vector<8x256xf32>
    %cst_8 = arith.constant 0.000000e+00 : f32
    %66 = vector.broadcast %cst_8 : f32 to vector<8x256xf32>
    %67 = vector.extract_strided_slice %0 {offsets = [0, 1], sizes = [8, 256], strides = [1, 1]} : vector<8x384xf32> to vector<8x256xf32>
    %68 = vector.extract_strided_slice %1 {offsets = [0, 1], sizes = [8, 1], strides = [1, 1]} : vector<8x128xf32> to vector<8x1xf32>
    %69 = vector.broadcast %68 : vector<8x1xf32> to vector<8x256xf32>
    %70 = arith.mulf %69, %67 : vector<8x256xf32>
    %71 = arith.addf %66, %70 : vector<8x256xf32>
    %72 = vector.extract_strided_slice %0 {offsets = [0, 17], sizes = [8, 256], strides = [1, 1]} : vector<8x384xf32> to vector<8x256xf32>
    %73 = vector.extract_strided_slice %1 {offsets = [0, 8], sizes = [8, 1], strides = [1, 1]} : vector<8x128xf32> to vector<8x1xf32>
    %74 = vector.broadcast %73 : vector<8x1xf32> to vector<8x256xf32>
    %75 = arith.mulf %74, %72 : vector<8x256xf32>
    %76 = arith.addf %71, %75 : vector<8x256xf32>
    %77 = vector.extract_strided_slice %0 {offsets = [0, 33], sizes = [8, 256], strides = [1, 1]} : vector<8x384xf32> to vector<8x256xf32>
    %78 = vector.extract_strided_slice %1 {offsets = [0, 15], sizes = [8, 1], strides = [1, 1]} : vector<8x128xf32> to vector<8x1xf32>
    %79 = vector.broadcast %78 : vector<8x1xf32> to vector<8x256xf32>
    %80 = arith.mulf %79, %77 : vector<8x256xf32>
    %81 = arith.addf %76, %80 : vector<8x256xf32>
    %82 = vector.extract_strided_slice %0 {offsets = [0, 49], sizes = [8, 256], strides = [1, 1]} : vector<8x384xf32> to vector<8x256xf32>
    %83 = vector.extract_strided_slice %1 {offsets = [0, 22], sizes = [8, 1], strides = [1, 1]} : vector<8x128xf32> to vector<8x1xf32>
    %84 = vector.broadcast %83 : vector<8x1xf32> to vector<8x256xf32>
    %85 = arith.mulf %84, %82 : vector<8x256xf32>
    %86 = arith.addf %81, %85 : vector<8x256xf32>
    %87 = vector.extract_strided_slice %0 {offsets = [0, 65], sizes = [8, 256], strides = [1, 1]} : vector<8x384xf32> to vector<8x256xf32>
    %88 = vector.extract_strided_slice %1 {offsets = [0, 29], sizes = [8, 1], strides = [1, 1]} : vector<8x128xf32> to vector<8x1xf32>
    %89 = vector.broadcast %88 : vector<8x1xf32> to vector<8x256xf32>
    %90 = arith.mulf %89, %87 : vector<8x256xf32>
    %91 = arith.addf %86, %90 : vector<8x256xf32>
    %92 = vector.extract_strided_slice %0 {offsets = [0, 81], sizes = [8, 256], strides = [1, 1]} : vector<8x384xf32> to vector<8x256xf32>
    %93 = vector.extract_strided_slice %1 {offsets = [0, 36], sizes = [8, 1], strides = [1, 1]} : vector<8x128xf32> to vector<8x1xf32>
    %94 = vector.broadcast %93 : vector<8x1xf32> to vector<8x256xf32>
    %95 = arith.mulf %94, %92 : vector<8x256xf32>
    %96 = arith.addf %91, %95 : vector<8x256xf32>
    %97 = vector.extract_strided_slice %0 {offsets = [0, 97], sizes = [8, 256], strides = [1, 1]} : vector<8x384xf32> to vector<8x256xf32>
    %98 = vector.extract_strided_slice %1 {offsets = [0, 43], sizes = [8, 1], strides = [1, 1]} : vector<8x128xf32> to vector<8x1xf32>
    %99 = vector.broadcast %98 : vector<8x1xf32> to vector<8x256xf32>
    %100 = arith.mulf %99, %97 : vector<8x256xf32>
    %101 = arith.addf %96, %100 : vector<8x256xf32>
    %c2_i32 = arith.constant 2 : i32
    %102 = vector.broadcast %c2_i32 : i32 to vector<8x256xi32>
    %103 = arith.cmpi sge, %18, %102 : vector<8x256xi32>
    %c17_i32 = arith.constant 17 : i32
    %104 = vector.broadcast %c17_i32 : i32 to vector<8x256xi32>
    %105 = arith.cmpi sle, %18, %104 : vector<8x256xi32>
    %106 = arith.andi %103, %105 : vector<8x256xi1>
    %107 = arith.extui %106 : vector<8x256xi1> to vector<8x256xi32>
    %108 = arith.sitofp %107 : vector<8x256xi32> to vector<8x256xf32>
    %109 = arith.mulf %108, %101 : vector<8x256xf32>
    %110 = arith.addf %65, %109 : vector<8x256xf32>
    %cst_9 = arith.constant 0.000000e+00 : f32
    %111 = vector.broadcast %cst_9 : f32 to vector<8x256xf32>
    %cst_10 = arith.constant 0.000000e+00 : f32
    %112 = vector.broadcast %cst_10 : f32 to vector<8x256xf32>
    %113 = vector.extract_strided_slice %0 {offsets = [0, 2], sizes = [8, 256], strides = [1, 1]} : vector<8x384xf32> to vector<8x256xf32>
    %114 = vector.extract_strided_slice %1 {offsets = [0, 2], sizes = [8, 1], strides = [1, 1]} : vector<8x128xf32> to vector<8x1xf32>
    %115 = vector.broadcast %114 : vector<8x1xf32> to vector<8x256xf32>
    %116 = arith.mulf %115, %113 : vector<8x256xf32>
    %117 = arith.addf %111, %116 : vector<8x256xf32>
    %118 = vector.extract_strided_slice %0 {offsets = [0, 18], sizes = [8, 256], strides = [1, 1]} : vector<8x384xf32> to vector<8x256xf32>
    %119 = vector.extract_strided_slice %1 {offsets = [0, 9], sizes = [8, 1], strides = [1, 1]} : vector<8x128xf32> to vector<8x1xf32>
    %120 = vector.broadcast %119 : vector<8x1xf32> to vector<8x256xf32>
    %121 = arith.mulf %120, %118 : vector<8x256xf32>
    %122 = arith.addf %117, %121 : vector<8x256xf32>
    %123 = vector.extract_strided_slice %0 {offsets = [0, 34], sizes = [8, 256], strides = [1, 1]} : vector<8x384xf32> to vector<8x256xf32>
    %124 = vector.extract_strided_slice %1 {offsets = [0, 16], sizes = [8, 1], strides = [1, 1]} : vector<8x128xf32> to vector<8x1xf32>
    %125 = vector.broadcast %124 : vector<8x1xf32> to vector<8x256xf32>
    %126 = arith.mulf %125, %123 : vector<8x256xf32>
    %127 = arith.addf %122, %126 : vector<8x256xf32>
    %128 = vector.extract_strided_slice %1 {offsets = [0, 49], sizes = [8, 1], strides = [1, 1]} : vector<8x128xf32> to vector<8x1xf32>
    %129 = vector.broadcast %128 : vector<8x1xf32> to vector<8x256xf32>
    %130 = arith.mulf %129, %123 : vector<8x256xf32>
    %131 = arith.addf %112, %130 : vector<8x256xf32>
    %132 = vector.extract_strided_slice %0 {offsets = [0, 50], sizes = [8, 256], strides = [1, 1]} : vector<8x384xf32> to vector<8x256xf32>
    %133 = vector.extract_strided_slice %1 {offsets = [0, 23], sizes = [8, 1], strides = [1, 1]} : vector<8x128xf32> to vector<8x1xf32>
    %134 = vector.broadcast %133 : vector<8x1xf32> to vector<8x256xf32>
    %135 = arith.mulf %134, %132 : vector<8x256xf32>
    %136 = arith.addf %127, %135 : vector<8x256xf32>
    %137 = vector.extract_strided_slice %1 {offsets = [0, 52], sizes = [8, 1], strides = [1, 1]} : vector<8x128xf32> to vector<8x1xf32>
    %138 = vector.broadcast %137 : vector<8x1xf32> to vector<8x256xf32>
    %139 = arith.mulf %138, %132 : vector<8x256xf32>
    %140 = arith.addf %131, %139 : vector<8x256xf32>
    %141 = vector.extract_strided_slice %0 {offsets = [0, 66], sizes = [8, 256], strides = [1, 1]} : vector<8x384xf32> to vector<8x256xf32>
    %142 = vector.extract_strided_slice %1 {offsets = [0, 30], sizes = [8, 1], strides = [1, 1]} : vector<8x128xf32> to vector<8x1xf32>
    %143 = vector.broadcast %142 : vector<8x1xf32> to vector<8x256xf32>
    %144 = arith.mulf %143, %141 : vector<8x256xf32>
    %145 = arith.addf %136, %144 : vector<8x256xf32>
    %146 = vector.extract_strided_slice %1 {offsets = [0, 55], sizes = [8, 1], strides = [1, 1]} : vector<8x128xf32> to vector<8x1xf32>
    %147 = vector.broadcast %146 : vector<8x1xf32> to vector<8x256xf32>
    %148 = arith.mulf %147, %141 : vector<8x256xf32>
    %149 = arith.addf %140, %148 : vector<8x256xf32>
    %150 = vector.extract_strided_slice %0 {offsets = [0, 82], sizes = [8, 256], strides = [1, 1]} : vector<8x384xf32> to vector<8x256xf32>
    %151 = vector.extract_strided_slice %1 {offsets = [0, 37], sizes = [8, 1], strides = [1, 1]} : vector<8x128xf32> to vector<8x1xf32>
    %152 = vector.broadcast %151 : vector<8x1xf32> to vector<8x256xf32>
    %153 = arith.mulf %152, %150 : vector<8x256xf32>
    %154 = arith.addf %145, %153 : vector<8x256xf32>
    %155 = vector.extract_strided_slice %0 {offsets = [0, 98], sizes = [8, 256], strides = [1, 1]} : vector<8x384xf32> to vector<8x256xf32>
    %156 = vector.extract_strided_slice %1 {offsets = [0, 44], sizes = [8, 1], strides = [1, 1]} : vector<8x128xf32> to vector<8x1xf32>
    %157 = vector.broadcast %156 : vector<8x1xf32> to vector<8x256xf32>
    %158 = arith.mulf %157, %155 : vector<8x256xf32>
    %159 = arith.addf %154, %158 : vector<8x256xf32>
    %c1_i32_11 = arith.constant 1 : i32
    %160 = vector.broadcast %c1_i32_11 : i32 to vector<8x256xi32>
    %161 = arith.cmpi sge, %18, %160 : vector<8x256xi32>
    %c16_i32_12 = arith.constant 16 : i32
    %162 = vector.broadcast %c16_i32_12 : i32 to vector<8x256xi32>
    %163 = arith.cmpi sle, %18, %162 : vector<8x256xi32>
    %164 = arith.andi %161, %163 : vector<8x256xi1>
    %165 = arith.extui %164 : vector<8x256xi1> to vector<8x256xi32>
    %166 = arith.sitofp %165 : vector<8x256xi32> to vector<8x256xf32>
    %167 = arith.mulf %166, %159 : vector<8x256xf32>
    %168 = arith.addf %110, %167 : vector<8x256xf32>
    %169 = arith.mulf %166, %149 : vector<8x256xf32>
    %170 = arith.addf %20, %169 : vector<8x256xf32>
    %cst_13 = arith.constant 0.000000e+00 : f32
    %171 = vector.broadcast %cst_13 : f32 to vector<8x256xf32>
    %cst_14 = arith.constant 0.000000e+00 : f32
    %172 = vector.broadcast %cst_14 : f32 to vector<8x256xf32>
    %173 = vector.extract_strided_slice %0 {offsets = [0, 3], sizes = [8, 256], strides = [1, 1]} : vector<8x384xf32> to vector<8x256xf32>
    %174 = vector.extract_strided_slice %1 {offsets = [0, 3], sizes = [8, 1], strides = [1, 1]} : vector<8x128xf32> to vector<8x1xf32>
    %175 = vector.broadcast %174 : vector<8x1xf32> to vector<8x256xf32>
    %176 = arith.mulf %175, %173 : vector<8x256xf32>
    %177 = arith.addf %171, %176 : vector<8x256xf32>
    %178 = vector.extract_strided_slice %0 {offsets = [0, 19], sizes = [8, 256], strides = [1, 1]} : vector<8x384xf32> to vector<8x256xf32>
    %179 = vector.extract_strided_slice %1 {offsets = [0, 10], sizes = [8, 1], strides = [1, 1]} : vector<8x128xf32> to vector<8x1xf32>
    %180 = vector.broadcast %179 : vector<8x1xf32> to vector<8x256xf32>
    %181 = arith.mulf %180, %178 : vector<8x256xf32>
    %182 = arith.addf %177, %181 : vector<8x256xf32>
    %183 = vector.extract_strided_slice %0 {offsets = [0, 35], sizes = [8, 256], strides = [1, 1]} : vector<8x384xf32> to vector<8x256xf32>
    %184 = vector.extract_strided_slice %1 {offsets = [0, 17], sizes = [8, 1], strides = [1, 1]} : vector<8x128xf32> to vector<8x1xf32>
    %185 = vector.broadcast %184 : vector<8x1xf32> to vector<8x256xf32>
    %186 = arith.mulf %185, %183 : vector<8x256xf32>
    %187 = arith.addf %182, %186 : vector<8x256xf32>
    %188 = vector.extract_strided_slice %1 {offsets = [0, 50], sizes = [8, 1], strides = [1, 1]} : vector<8x128xf32> to vector<8x1xf32>
    %189 = vector.broadcast %188 : vector<8x1xf32> to vector<8x256xf32>
    %190 = arith.mulf %189, %183 : vector<8x256xf32>
    %191 = arith.addf %172, %190 : vector<8x256xf32>
    %192 = vector.extract_strided_slice %0 {offsets = [0, 51], sizes = [8, 256], strides = [1, 1]} : vector<8x384xf32> to vector<8x256xf32>
    %193 = vector.extract_strided_slice %1 {offsets = [0, 24], sizes = [8, 1], strides = [1, 1]} : vector<8x128xf32> to vector<8x1xf32>
    %194 = vector.broadcast %193 : vector<8x1xf32> to vector<8x256xf32>
    %195 = arith.mulf %194, %192 : vector<8x256xf32>
    %196 = arith.addf %187, %195 : vector<8x256xf32>
    %197 = vector.extract_strided_slice %1 {offsets = [0, 53], sizes = [8, 1], strides = [1, 1]} : vector<8x128xf32> to vector<8x1xf32>
    %198 = vector.broadcast %197 : vector<8x1xf32> to vector<8x256xf32>
    %199 = arith.mulf %198, %192 : vector<8x256xf32>
    %200 = arith.addf %191, %199 : vector<8x256xf32>
    %201 = vector.extract_strided_slice %0 {offsets = [0, 67], sizes = [8, 256], strides = [1, 1]} : vector<8x384xf32> to vector<8x256xf32>
    %202 = vector.extract_strided_slice %1 {offsets = [0, 31], sizes = [8, 1], strides = [1, 1]} : vector<8x128xf32> to vector<8x1xf32>
    %203 = vector.broadcast %202 : vector<8x1xf32> to vector<8x256xf32>
    %204 = arith.mulf %203, %201 : vector<8x256xf32>
    %205 = arith.addf %196, %204 : vector<8x256xf32>
    %206 = vector.extract_strided_slice %1 {offsets = [0, 56], sizes = [8, 1], strides = [1, 1]} : vector<8x128xf32> to vector<8x1xf32>
    %207 = vector.broadcast %206 : vector<8x1xf32> to vector<8x256xf32>
    %208 = arith.mulf %207, %201 : vector<8x256xf32>
    %209 = arith.addf %200, %208 : vector<8x256xf32>
    %210 = vector.extract_strided_slice %0 {offsets = [0, 83], sizes = [8, 256], strides = [1, 1]} : vector<8x384xf32> to vector<8x256xf32>
    %211 = vector.extract_strided_slice %1 {offsets = [0, 38], sizes = [8, 1], strides = [1, 1]} : vector<8x128xf32> to vector<8x1xf32>
    %212 = vector.broadcast %211 : vector<8x1xf32> to vector<8x256xf32>
    %213 = arith.mulf %212, %210 : vector<8x256xf32>
    %214 = arith.addf %205, %213 : vector<8x256xf32>
    %215 = vector.extract_strided_slice %0 {offsets = [0, 99], sizes = [8, 256], strides = [1, 1]} : vector<8x384xf32> to vector<8x256xf32>
    %216 = vector.extract_strided_slice %1 {offsets = [0, 45], sizes = [8, 1], strides = [1, 1]} : vector<8x128xf32> to vector<8x1xf32>
    %217 = vector.broadcast %216 : vector<8x1xf32> to vector<8x256xf32>
    %218 = arith.mulf %217, %215 : vector<8x256xf32>
    %219 = arith.addf %214, %218 : vector<8x256xf32>
    %220 = arith.addf %168, %219 : vector<8x256xf32>
    %221 = arith.addf %170, %209 : vector<8x256xf32>
    %cst_15 = arith.constant 0.000000e+00 : f32
    %222 = vector.broadcast %cst_15 : f32 to vector<8x256xf32>
    %cst_16 = arith.constant 0.000000e+00 : f32
    %223 = vector.broadcast %cst_16 : f32 to vector<8x256xf32>
    %224 = vector.extract_strided_slice %0 {offsets = [0, 4], sizes = [8, 256], strides = [1, 1]} : vector<8x384xf32> to vector<8x256xf32>
    %225 = vector.extract_strided_slice %1 {offsets = [0, 4], sizes = [8, 1], strides = [1, 1]} : vector<8x128xf32> to vector<8x1xf32>
    %226 = vector.broadcast %225 : vector<8x1xf32> to vector<8x256xf32>
    %227 = arith.mulf %226, %224 : vector<8x256xf32>
    %228 = arith.addf %222, %227 : vector<8x256xf32>
    %229 = vector.extract_strided_slice %0 {offsets = [0, 20], sizes = [8, 256], strides = [1, 1]} : vector<8x384xf32> to vector<8x256xf32>
    %230 = vector.extract_strided_slice %1 {offsets = [0, 11], sizes = [8, 1], strides = [1, 1]} : vector<8x128xf32> to vector<8x1xf32>
    %231 = vector.broadcast %230 : vector<8x1xf32> to vector<8x256xf32>
    %232 = arith.mulf %231, %229 : vector<8x256xf32>
    %233 = arith.addf %228, %232 : vector<8x256xf32>
    %234 = vector.extract_strided_slice %0 {offsets = [0, 36], sizes = [8, 256], strides = [1, 1]} : vector<8x384xf32> to vector<8x256xf32>
    %235 = vector.extract_strided_slice %1 {offsets = [0, 18], sizes = [8, 1], strides = [1, 1]} : vector<8x128xf32> to vector<8x1xf32>
    %236 = vector.broadcast %235 : vector<8x1xf32> to vector<8x256xf32>
    %237 = arith.mulf %236, %234 : vector<8x256xf32>
    %238 = arith.addf %233, %237 : vector<8x256xf32>
    %239 = vector.extract_strided_slice %1 {offsets = [0, 51], sizes = [8, 1], strides = [1, 1]} : vector<8x128xf32> to vector<8x1xf32>
    %240 = vector.broadcast %239 : vector<8x1xf32> to vector<8x256xf32>
    %241 = arith.mulf %240, %234 : vector<8x256xf32>
    %242 = arith.addf %223, %241 : vector<8x256xf32>
    %243 = vector.extract_strided_slice %0 {offsets = [0, 52], sizes = [8, 256], strides = [1, 1]} : vector<8x384xf32> to vector<8x256xf32>
    %244 = vector.extract_strided_slice %1 {offsets = [0, 25], sizes = [8, 1], strides = [1, 1]} : vector<8x128xf32> to vector<8x1xf32>
    %245 = vector.broadcast %244 : vector<8x1xf32> to vector<8x256xf32>
    %246 = arith.mulf %245, %243 : vector<8x256xf32>
    %247 = arith.addf %238, %246 : vector<8x256xf32>
    %248 = vector.extract_strided_slice %1 {offsets = [0, 54], sizes = [8, 1], strides = [1, 1]} : vector<8x128xf32> to vector<8x1xf32>
    %249 = vector.broadcast %248 : vector<8x1xf32> to vector<8x256xf32>
    %250 = arith.mulf %249, %243 : vector<8x256xf32>
    %251 = arith.addf %242, %250 : vector<8x256xf32>
    %252 = vector.extract_strided_slice %0 {offsets = [0, 68], sizes = [8, 256], strides = [1, 1]} : vector<8x384xf32> to vector<8x256xf32>
    %253 = vector.extract_strided_slice %1 {offsets = [0, 32], sizes = [8, 1], strides = [1, 1]} : vector<8x128xf32> to vector<8x1xf32>
    %254 = vector.broadcast %253 : vector<8x1xf32> to vector<8x256xf32>
    %255 = arith.mulf %254, %252 : vector<8x256xf32>
    %256 = arith.addf %247, %255 : vector<8x256xf32>
    %257 = vector.extract_strided_slice %1 {offsets = [0, 57], sizes = [8, 1], strides = [1, 1]} : vector<8x128xf32> to vector<8x1xf32>
    %258 = vector.broadcast %257 : vector<8x1xf32> to vector<8x256xf32>
    %259 = arith.mulf %258, %252 : vector<8x256xf32>
    %260 = arith.addf %251, %259 : vector<8x256xf32>
    %261 = vector.extract_strided_slice %0 {offsets = [0, 84], sizes = [8, 256], strides = [1, 1]} : vector<8x384xf32> to vector<8x256xf32>
    %262 = vector.extract_strided_slice %1 {offsets = [0, 39], sizes = [8, 1], strides = [1, 1]} : vector<8x128xf32> to vector<8x1xf32>
    %263 = vector.broadcast %262 : vector<8x1xf32> to vector<8x256xf32>
    %264 = arith.mulf %263, %261 : vector<8x256xf32>
    %265 = arith.addf %256, %264 : vector<8x256xf32>
    %266 = vector.extract_strided_slice %0 {offsets = [0, 100], sizes = [8, 256], strides = [1, 1]} : vector<8x384xf32> to vector<8x256xf32>
    %267 = vector.extract_strided_slice %1 {offsets = [0, 46], sizes = [8, 1], strides = [1, 1]} : vector<8x128xf32> to vector<8x1xf32>
    %268 = vector.broadcast %267 : vector<8x1xf32> to vector<8x256xf32>
    %269 = arith.mulf %268, %266 : vector<8x256xf32>
    %270 = arith.addf %265, %269 : vector<8x256xf32>
    %c-1_i32 = arith.constant -1 : i32
    %271 = vector.broadcast %c-1_i32 : i32 to vector<8x256xi32>
    %272 = arith.cmpi sge, %18, %271 : vector<8x256xi32>
    %c14_i32 = arith.constant 14 : i32
    %273 = vector.broadcast %c14_i32 : i32 to vector<8x256xi32>
    %274 = arith.cmpi sle, %18, %273 : vector<8x256xi32>
    %275 = arith.andi %272, %274 : vector<8x256xi1>
    %276 = arith.extui %275 : vector<8x256xi1> to vector<8x256xi32>
    %277 = arith.sitofp %276 : vector<8x256xi32> to vector<8x256xf32>
    %278 = arith.mulf %277, %270 : vector<8x256xf32>
    %279 = arith.addf %220, %278 : vector<8x256xf32>
    %280 = arith.mulf %277, %260 : vector<8x256xf32>
    %281 = arith.addf %221, %280 : vector<8x256xf32>
    %cst_17 = arith.constant 0.000000e+00 : f32
    %282 = vector.broadcast %cst_17 : f32 to vector<8x256xf32>
    %283 = vector.extract_strided_slice %0 {offsets = [0, 5], sizes = [8, 256], strides = [1, 1]} : vector<8x384xf32> to vector<8x256xf32>
    %284 = vector.extract_strided_slice %1 {offsets = [0, 5], sizes = [8, 1], strides = [1, 1]} : vector<8x128xf32> to vector<8x1xf32>
    %285 = vector.broadcast %284 : vector<8x1xf32> to vector<8x256xf32>
    %286 = arith.mulf %285, %283 : vector<8x256xf32>
    %287 = arith.addf %282, %286 : vector<8x256xf32>
    %288 = vector.extract_strided_slice %0 {offsets = [0, 21], sizes = [8, 256], strides = [1, 1]} : vector<8x384xf32> to vector<8x256xf32>
    %289 = vector.extract_strided_slice %1 {offsets = [0, 12], sizes = [8, 1], strides = [1, 1]} : vector<8x128xf32> to vector<8x1xf32>
    %290 = vector.broadcast %289 : vector<8x1xf32> to vector<8x256xf32>
    %291 = arith.mulf %290, %288 : vector<8x256xf32>
    %292 = arith.addf %287, %291 : vector<8x256xf32>
    %293 = vector.extract_strided_slice %0 {offsets = [0, 37], sizes = [8, 256], strides = [1, 1]} : vector<8x384xf32> to vector<8x256xf32>
    %294 = vector.extract_strided_slice %1 {offsets = [0, 19], sizes = [8, 1], strides = [1, 1]} : vector<8x128xf32> to vector<8x1xf32>
    %295 = vector.broadcast %294 : vector<8x1xf32> to vector<8x256xf32>
    %296 = arith.mulf %295, %293 : vector<8x256xf32>
    %297 = arith.addf %292, %296 : vector<8x256xf32>
    %298 = vector.extract_strided_slice %0 {offsets = [0, 53], sizes = [8, 256], strides = [1, 1]} : vector<8x384xf32> to vector<8x256xf32>
    %299 = vector.extract_strided_slice %1 {offsets = [0, 26], sizes = [8, 1], strides = [1, 1]} : vector<8x128xf32> to vector<8x1xf32>
    %300 = vector.broadcast %299 : vector<8x1xf32> to vector<8x256xf32>
    %301 = arith.mulf %300, %298 : vector<8x256xf32>
    %302 = arith.addf %297, %301 : vector<8x256xf32>
    %303 = vector.extract_strided_slice %0 {offsets = [0, 69], sizes = [8, 256], strides = [1, 1]} : vector<8x384xf32> to vector<8x256xf32>
    %304 = vector.extract_strided_slice %1 {offsets = [0, 33], sizes = [8, 1], strides = [1, 1]} : vector<8x128xf32> to vector<8x1xf32>
    %305 = vector.broadcast %304 : vector<8x1xf32> to vector<8x256xf32>
    %306 = arith.mulf %305, %303 : vector<8x256xf32>
    %307 = arith.addf %302, %306 : vector<8x256xf32>
    %308 = vector.extract_strided_slice %0 {offsets = [0, 85], sizes = [8, 256], strides = [1, 1]} : vector<8x384xf32> to vector<8x256xf32>
    %309 = vector.extract_strided_slice %1 {offsets = [0, 40], sizes = [8, 1], strides = [1, 1]} : vector<8x128xf32> to vector<8x1xf32>
    %310 = vector.broadcast %309 : vector<8x1xf32> to vector<8x256xf32>
    %311 = arith.mulf %310, %308 : vector<8x256xf32>
    %312 = arith.addf %307, %311 : vector<8x256xf32>
    %313 = vector.extract_strided_slice %0 {offsets = [0, 101], sizes = [8, 256], strides = [1, 1]} : vector<8x384xf32> to vector<8x256xf32>
    %314 = vector.extract_strided_slice %1 {offsets = [0, 47], sizes = [8, 1], strides = [1, 1]} : vector<8x128xf32> to vector<8x1xf32>
    %315 = vector.broadcast %314 : vector<8x1xf32> to vector<8x256xf32>
    %316 = arith.mulf %315, %313 : vector<8x256xf32>
    %317 = arith.addf %312, %316 : vector<8x256xf32>
    %c-2_i32 = arith.constant -2 : i32
    %318 = vector.broadcast %c-2_i32 : i32 to vector<8x256xi32>
    %319 = arith.cmpi sge, %18, %318 : vector<8x256xi32>
    %c13_i32 = arith.constant 13 : i32
    %320 = vector.broadcast %c13_i32 : i32 to vector<8x256xi32>
    %321 = arith.cmpi sle, %18, %320 : vector<8x256xi32>
    %322 = arith.andi %319, %321 : vector<8x256xi1>
    %323 = arith.extui %322 : vector<8x256xi1> to vector<8x256xi32>
    %324 = arith.sitofp %323 : vector<8x256xi32> to vector<8x256xf32>
    %325 = arith.mulf %324, %317 : vector<8x256xf32>
    %326 = arith.addf %279, %325 : vector<8x256xf32>
    %cst_18 = arith.constant 0.000000e+00 : f32
    %327 = vector.broadcast %cst_18 : f32 to vector<8x256xf32>
    %328 = vector.extract_strided_slice %0 {offsets = [0, 6], sizes = [8, 256], strides = [1, 1]} : vector<8x384xf32> to vector<8x256xf32>
    %329 = vector.extract_strided_slice %1 {offsets = [0, 6], sizes = [8, 1], strides = [1, 1]} : vector<8x128xf32> to vector<8x1xf32>
    %330 = vector.broadcast %329 : vector<8x1xf32> to vector<8x256xf32>
    %331 = arith.mulf %330, %328 : vector<8x256xf32>
    %332 = arith.addf %327, %331 : vector<8x256xf32>
    %333 = vector.extract_strided_slice %0 {offsets = [0, 22], sizes = [8, 256], strides = [1, 1]} : vector<8x384xf32> to vector<8x256xf32>
    %334 = vector.extract_strided_slice %1 {offsets = [0, 13], sizes = [8, 1], strides = [1, 1]} : vector<8x128xf32> to vector<8x1xf32>
    %335 = vector.broadcast %334 : vector<8x1xf32> to vector<8x256xf32>
    %336 = arith.mulf %335, %333 : vector<8x256xf32>
    %337 = arith.addf %332, %336 : vector<8x256xf32>
    %338 = vector.extract_strided_slice %0 {offsets = [0, 38], sizes = [8, 256], strides = [1, 1]} : vector<8x384xf32> to vector<8x256xf32>
    %339 = vector.extract_strided_slice %1 {offsets = [0, 20], sizes = [8, 1], strides = [1, 1]} : vector<8x128xf32> to vector<8x1xf32>
    %340 = vector.broadcast %339 : vector<8x1xf32> to vector<8x256xf32>
    %341 = arith.mulf %340, %338 : vector<8x256xf32>
    %342 = arith.addf %337, %341 : vector<8x256xf32>
    %343 = vector.extract_strided_slice %0 {offsets = [0, 54], sizes = [8, 256], strides = [1, 1]} : vector<8x384xf32> to vector<8x256xf32>
    %344 = vector.extract_strided_slice %1 {offsets = [0, 27], sizes = [8, 1], strides = [1, 1]} : vector<8x128xf32> to vector<8x1xf32>
    %345 = vector.broadcast %344 : vector<8x1xf32> to vector<8x256xf32>
    %346 = arith.mulf %345, %343 : vector<8x256xf32>
    %347 = arith.addf %342, %346 : vector<8x256xf32>
    %348 = vector.extract_strided_slice %0 {offsets = [0, 70], sizes = [8, 256], strides = [1, 1]} : vector<8x384xf32> to vector<8x256xf32>
    %349 = vector.extract_strided_slice %1 {offsets = [0, 34], sizes = [8, 1], strides = [1, 1]} : vector<8x128xf32> to vector<8x1xf32>
    %350 = vector.broadcast %349 : vector<8x1xf32> to vector<8x256xf32>
    %351 = arith.mulf %350, %348 : vector<8x256xf32>
    %352 = arith.addf %347, %351 : vector<8x256xf32>
    %353 = vector.extract_strided_slice %0 {offsets = [0, 86], sizes = [8, 256], strides = [1, 1]} : vector<8x384xf32> to vector<8x256xf32>
    %354 = vector.extract_strided_slice %1 {offsets = [0, 41], sizes = [8, 1], strides = [1, 1]} : vector<8x128xf32> to vector<8x1xf32>
    %355 = vector.broadcast %354 : vector<8x1xf32> to vector<8x256xf32>
    %356 = arith.mulf %355, %353 : vector<8x256xf32>
    %357 = arith.addf %352, %356 : vector<8x256xf32>
    %358 = vector.extract_strided_slice %0 {offsets = [0, 102], sizes = [8, 256], strides = [1, 1]} : vector<8x384xf32> to vector<8x256xf32>
    %359 = vector.extract_strided_slice %1 {offsets = [0, 48], sizes = [8, 1], strides = [1, 1]} : vector<8x128xf32> to vector<8x1xf32>
    %360 = vector.broadcast %359 : vector<8x1xf32> to vector<8x256xf32>
    %361 = arith.mulf %360, %358 : vector<8x256xf32>
    %362 = arith.addf %357, %361 : vector<8x256xf32>
    %c-3_i32 = arith.constant -3 : i32
    %363 = vector.broadcast %c-3_i32 : i32 to vector<8x256xi32>
    %364 = arith.cmpi sge, %18, %363 : vector<8x256xi32>
    %c12_i32 = arith.constant 12 : i32
    %365 = vector.broadcast %c12_i32 : i32 to vector<8x256xi32>
    %366 = arith.cmpi sle, %18, %365 : vector<8x256xi32>
    %367 = arith.andi %364, %366 : vector<8x256xi1>
    %368 = arith.extui %367 : vector<8x256xi1> to vector<8x256xi32>
    %369 = arith.sitofp %368 : vector<8x256xi32> to vector<8x256xf32>
    %370 = arith.mulf %369, %362 : vector<8x256xf32>
    %371 = arith.addf %326, %370 : vector<8x256xf32>
    %372 = vector.extract_strided_slice %1 {offsets = [0, 61], sizes = [8, 8], strides = [1, 1]} : vector<8x128xf32> to vector<8x8xf32>
    %cst_19 = arith.constant dense<0.000000e+00> : vector<8x256xf32>
    %373 = tpu.matmul %372, %281, %cst_19 {dimension_numbers = #tpu.dot_dimension_numbers<[1], [0], [0], [1], [0, 0, 1, 1], [], []>} : vector<8x8xf32>, vector<8x256xf32>, vector<8x256xf32> -> vector<8x256xf32>
    %374 = arith.addf %373, %371 : vector<8x256xf32>
    %375 = arith.addf %374, %192 : vector<8x256xf32>
    %376 = vector.extract_strided_slice %1 {offsets = [0, 58], sizes = [8, 1], strides = [1, 1]} : vector<8x128xf32> to vector<8x1xf32>
    %377 = vector.broadcast %376 : vector<8x1xf32> to vector<8x256xf32>
    %378 = arith.addf %375, %377 : vector<8x256xf32>
    %379 = vector.extract_strided_slice %1 {offsets = [0, 69], sizes = [8, 8], strides = [1, 1]} : vector<8x128xf32> to vector<8x8xf32>
    %cst_20 = arith.constant dense<0.000000e+00> : vector<8x256xf32>
    %380 = tpu.matmul %379, %378, %cst_20 {dimension_numbers = #tpu.dot_dimension_numbers<[1], [0], [0], [1], [0, 0, 1, 1], [], []>, precision = #tpu.contract_precision<fp32>} : vector<8x8xf32>, vector<8x256xf32>, vector<8x256xf32> -> vector<8x256xf32>
    %381 = arith.mulf %378, %378 : vector<8x256xf32>
    %cst_21 = arith.constant dense<0.000000e+00> : vector<8x256xf32>
    %382 = tpu.matmul %379, %381, %cst_21 {dimension_numbers = #tpu.dot_dimension_numbers<[1], [0], [0], [1], [0, 0, 1, 1], [], []>, precision = #tpu.contract_precision<fp32>} : vector<8x8xf32>, vector<8x256xf32>, vector<8x256xf32> -> vector<8x256xf32>
    %cst_22 = arith.constant dense<0.000000e+00> : vector<8xf32>
    %383 = vector.multi_reduction <add>, %380, %cst_22 [1] : vector<8x256xf32> to vector<8xf32>
    %384 = vector.shape_cast %383 : vector<8xf32> to vector<8x1xf32>
    %cst_23 = arith.constant dense<0.000000e+00> : vector<8xf32>
    %385 = vector.multi_reduction <add>, %382, %cst_23 [1] : vector<8x256xf32> to vector<8xf32>
    %386 = vector.shape_cast %385 : vector<8xf32> to vector<8x1xf32>
    %387 = arith.mulf %384, %384 : vector<8x1xf32>
    %388 = arith.subf %386, %387 : vector<8x1xf32>
    %cst_24 = arith.constant 9.99999974E-6 : f32
    %389 = vector.broadcast %cst_24 : f32 to vector<8x1xf32>
    %390 = arith.addf %388, %389 : vector<8x1xf32>
    %391 = math.rsqrt %390 : vector<8x1xf32>
    %392 = vector.extract_strided_slice %1 {offsets = [0, 59], sizes = [8, 1], strides = [1, 1]} : vector<8x128xf32> to vector<8x1xf32>
    %393 = arith.mulf %392, %391 : vector<8x1xf32>
    %394 = vector.extract_strided_slice %1 {offsets = [0, 60], sizes = [8, 1], strides = [1, 1]} : vector<8x128xf32> to vector<8x1xf32>
    %395 = arith.mulf %384, %393 : vector<8x1xf32>
    %396 = arith.subf %394, %395 : vector<8x1xf32>
    %397 = vector.broadcast %393 : vector<8x1xf32> to vector<8x256xf32>
    %398 = arith.mulf %378, %397 : vector<8x256xf32>
    %399 = vector.broadcast %396 : vector<8x1xf32> to vector<8x256xf32>
    %400 = arith.addf %398, %399 : vector<8x256xf32>
    %cst_25 = arith.constant 0.000000e+00 : f32
    %401 = vector.broadcast %cst_25 : f32 to vector<8x256xf32>
    %402 = arith.maximumf %400, %401 : vector<8x256xf32>
    %c0_26 = arith.constant 0 : index
    %c0_27 = arith.constant 0 : index
    %403 = vector.load %arg2[%c0_26, %c0_27] : memref<8x256xf32, #tpu.memory_space<vmem>>, vector<8x256xf32>
    tpu.vector_store %arg2[%c0_26, %c0_27], %402 {strides = array<i32>} : memref<8x256xf32, #tpu.memory_space<vmem>>, vector<8x256xf32>,
    return
  }
}

</mosaic_0001>

<llo_original>
// kernel: tpu_custom_call.1
$region0: #{tpu_custom_call.1}
  #allocation0 [shape = 'u32[]', space=smem, size = 0x4, offset = 0x4, fixed_abs, tag = 'smem constant byte address 0x4 - core index']
  #allocation1 [shape = 'u32[144,128]{1,0:T(1,128)}', space=vmem, size = 0x12000, scoped, tag = 'internal scratch']
  %s0 = inlined_call_operand.hbm [shape: f32[8,384], index: 0, kind: input, shape index: {}]
  %s1 = inlined_call_operand.hbm [shape: f32[8,128], index: 1, kind: input, shape index: {}]
  %s2 = inlined_call_operand.hbm [shape: f32[8,256], index: 2, kind: output, shape index: {}]
  %s3 = sld [smem:[#allocation0]]
  $region26: #{tpu_custom_call.1} parent=0
    _
  %s5 = ssub.s32 1, %s3
  %s6 = scalar_select 0, %s5, %s3
  $region1: #{tpu_custom_call.1} parent=0
    #allocation2 [shape = 'u8[12288]{0}', space=vmem, size = 0x3000, scoped, tag = 'input window, operand 0, single buffered']
    #allocation3 [shape = 's32[1]{0}', space=sflag, size = 0x4, scoped, tag = 'scoped memory for tpu_custom_call.1']
    #allocation4 [shape = 's32[1]{0}', space=sflag, size = 0x4, scoped, tag = 'scoped memory for tpu_custom_call.1']
    #allocation5 [shape = 'u8[4096]{0}', space=vmem, size = 0x1000, scoped, tag = 'input window, operand 1, single buffered']
    #allocation6 [shape = 's32[1]{0}', space=sflag, size = 0x4, scoped, tag = 'scoped memory for tpu_custom_call.1']
    #allocation7 [shape = 'u8[8192]{0}', space=vmem, size = 0x2000, scoped, tag = 'output window, operand 0, single buffered']
    %7 = vsyncpa [#allocation3], 0
    %8 = vsyncpa [#allocation6], 0
    %9 = vsyncpa [#allocation4], 0
    // Predicated region
    $region2: #{tpu_custom_call.1} parent=1 // pred_check
      _
    $region3: #{tpu_custom_call.1} parent=1 // pred_check_branch
      %11 = sbr.rel (0) target = $region5
    $region4: #{tpu_custom_call.1} parent=1 // pred_region
      %s13 = ssub.s32 384, 384
      %14 = vsyncadd [#allocation3], %s13
      %s16 = sshll.u32 [#allocation2], 4
      %s17 = int_to_ptr.vmem [resolvable:$true] %s16
      %19 = dma.hbm_to_vmem [thread:$0]  %s0, 384, %s17, [#allocation3]
    $region5: #{tpu_custom_call.1} parent=1 // pred_fallthru
      _
    // Predicated region
    $region6: #{tpu_custom_call.1} parent=1 // pred_check
      _
    $region7: #{tpu_custom_call.1} parent=1 // pred_check_branch
      %21 = sbr.rel (0) target = $region9
    $region8: #{tpu_custom_call.1} parent=1 // pred_region
      %s23 = ssub.s32 128, 128
      %24 = vsyncadd [#allocation6], %s23
      %s26 = sshll.u32 [#allocation5], 4
      %s27 = int_to_ptr.vmem [resolvable:$true] %s26
      %29 = dma.hbm_to_vmem [thread:$0]  %s1, 128, %s27, [#allocation6]
    $region9: #{tpu_custom_call.1} parent=1 // pred_fallthru
      _
    // Predicated region
    $region10: #{tpu_custom_call.1} parent=1 // pred_check
      _
    $region11: #{tpu_custom_call.1} parent=1 // pred_check_branch
      %31 = sbr.rel (0) target = $region13
    $region12: #{tpu_custom_call.1} parent=1 // pred_region
      %32 = dma.done [#allocation3], 384
    $region13: #{tpu_custom_call.1} parent=1 // pred_fallthru
      _
    // Predicated region
    $region14: #{tpu_custom_call.1} parent=1 // pred_check
      _
    $region15: #{tpu_custom_call.1} parent=1 // pred_check_branch
      %34 = sbr.rel (0) target = $region17
    $region16: #{tpu_custom_call.1} parent=1 // pred_region
      %35 = dma.done [#allocation6], 128
    $region17: #{tpu_custom_call.1} parent=1 // pred_fallthru
      _
    %v36 = vld [vmem:[#allocation2] sm:$0xff]
    %v37 = vld [vmem:[#allocation2 + $0x8] sm:$0xff]
    %v38 = vld [vmem:[#allocation2 + $0x10] sm:$0xff]
    %v39 = vld [vmem:[#allocation5] sm:$0xff]
    %v40 = vlaneseq
    %v41 = vand.u32 %v40, 127
    %v42 = vadd.s32 %v41, 128
    %vm43 = vcmp.lt.s32.totalorder %v41, 0
    %v44 = vsub.s32 0, %v41
    %v45 = vsel %vm43, %v44, %v41
    %v46 = vshrl.u32 %v45, 4
    %v47 = vand.u32 %v45, 15
    %v48 = vsub.s32 0, %v47
    %v49 = vsel %vm43, %v48, %v47
    %vm50 = vcmp.lt.s32.totalorder %v42, 0
    %v51 = vsub.s32 0, %v42
    %v52 = vsel %vm50, %v51, %v42
    %v53 = vshrl.u32 %v52, 4
    %v54 = vand.u32 %v52, 15
    %v55 = vsub.s32 0, %v54
    %v56 = vsel %vm50, %v55, %v54
    %vm57 = vcmp.ne.s32.totalorder %v49, 0
    %vm58 = vcmp.ne.s32.totalorder %v56, 0
    %vm59 = vcmp.lt.s32.totalorder %v49, 0
    %vm60 = vcmp.lt.s32.totalorder %v56, 0
    %vm61 = vmand %vm59, %vm57
    %vm62 = vmand %vm60, %vm58
    %v63 = vadd.s32 %v49, 16
    %v64 = vadd.s32 %v56, 16
    %v65 = vsel %vm61, %v63, %v49
    %v66 = vsel %vm62, %v64, %v56
    %68 = vset.pattern.permute.xlu0 0
    %69 = vperm.xlu0 %68, %v39
    %v70 = vpop.permute.xlu0 %69
    %v72 = vmul.f32 %v70, %v36
    %v73 = vmul.f32 %v70, %v37
    %v74 = vadd.f32 %v72, 0.0
    %v75 = vadd.f32 %v73, 0.0
    %76 = vset.pattern.permute.xlu0 7
    %77 = vperm.xlu0 %76, %v39
    %v78 = vpop.permute.xlu0 %77
    %v80 = vmul.f32 %v78, %v36
    %v81 = vmul.f32 %v78, %v37
    %v82 = vmul.f32 %v78, %v38
    %86 = vrot.lane.b32.xlu0 %v80, 112
    %v87 = vpop.permute.xlu0 %86
    %88 = vrot.lane.b32.xlu0 %v81, 112
    %v89 = vpop.permute.xlu0 %88
    %90 = vrot.lane.b32.xlu0 %v82, 112
    %v91 = vpop.permute.xlu0 %90
    %vm92 = vcmask 916480
    %v93 = vsel %vm92, %v87, %v89
    %v94 = vsel %vm92, %v89, %v91
    %v97 = vadd.f32 %v74, %v93
    %v98 = vadd.f32 %v75, %v94
    %99 = vset.pattern.permute.xlu0 14
    %100 = vperm.xlu0 %99, %v39
    %v101 = vpop.permute.xlu0 %100
    %v103 = vmul.f32 %v101, %v36
    %v104 = vmul.f32 %v101, %v37
    %v105 = vmul.f32 %v101, %v38
    %109 = vrot.lane.b32.xlu0 %v103, 96
    %v110 = vpop.permute.xlu0 %109
    %111 = vrot.lane.b32.xlu0 %v104, 96
    %v112 = vpop.permute.xlu0 %111
    %113 = vrot.lane.b32.xlu0 %v105, 96
    %v114 = vpop.permute.xlu0 %113
    %vm115 = vcmask 785408
    %v116 = vsel %vm115, %v110, %v112
    %v117 = vsel %vm115, %v112, %v114
    %v120 = vadd.f32 %v97, %v116
    %v121 = vadd.f32 %v98, %v117
    %122 = vset.pattern.permute.xlu0 21
    %123 = vperm.xlu0 %122, %v39
    %v124 = vpop.permute.xlu0 %123
    %v126 = vmul.f32 %v124, %v36
    %v127 = vmul.f32 %v124, %v37
    %v128 = vmul.f32 %v124, %v38
    %132 = vrot.lane.b32.xlu0 %v126, 80
    %v133 = vpop.permute.xlu0 %132
    %134 = vrot.lane.b32.xlu0 %v127, 80
    %v135 = vpop.permute.xlu0 %134
    %136 = vrot.lane.b32.xlu0 %v128, 80
    %v137 = vpop.permute.xlu0 %136
    %vm138 = vcmask 654336
    %v139 = vsel %vm138, %v133, %v135
    %v140 = vsel %vm138, %v135, %v137
    %v143 = vadd.f32 %v120, %v139
    %v144 = vadd.f32 %v121, %v140
    %145 = vset.pattern.permute.xlu0 28
    %146 = vperm.xlu0 %145, %v39
    %v147 = vpop.permute.xlu0 %146
    %v149 = vmul.f32 %v147, %v36
    %v150 = vmul.f32 %v147, %v37
    %v151 = vmul.f32 %v147, %v38
    %155 = vrot.lane.b32.xlu0 %v149, 64
    %v156 = vpop.permute.xlu0 %155
    %157 = vrot.lane.b32.xlu0 %v150, 64
    %v158 = vpop.permute.xlu0 %157
    %159 = vrot.lane.b32.xlu0 %v151, 64
    %v160 = vpop.permute.xlu0 %159
    %vm161 = vcmask 523264
    %v162 = vsel %vm161, %v156, %v158
    %v163 = vsel %vm161, %v158, %v160
    %v166 = vadd.f32 %v143, %v162
    %v167 = vadd.f32 %v144, %v163
    %168 = vset.pattern.permute.xlu0 35
    %169 = vperm.xlu0 %168, %v39
    %v170 = vpop.permute.xlu0 %169
    %v172 = vmul.f32 %v170, %v36
    %v173 = vmul.f32 %v170, %v37
    %v174 = vmul.f32 %v170, %v38
    %178 = vrot.lane.b32.xlu0 %v172, 48
    %v179 = vpop.permute.xlu0 %178
    %180 = vrot.lane.b32.xlu0 %v173, 48
    %v181 = vpop.permute.xlu0 %180
    %182 = vrot.lane.b32.xlu0 %v174, 48
    %v183 = vpop.permute.xlu0 %182
    %vm184 = vcmask 392192
    %v185 = vsel %vm184, %v179, %v181
    %v186 = vsel %vm184, %v181, %v183
    %v189 = vadd.f32 %v166, %v185
    %v190 = vadd.f32 %v167, %v186
    %191 = vset.pattern.permute.xlu0 42
    %192 = vperm.xlu0 %191, %v39
    %v193 = vpop.permute.xlu0 %192
    %v195 = vmul.f32 %v193, %v36
    %v196 = vmul.f32 %v193, %v37
    %v197 = vmul.f32 %v193, %v38
    %201 = vrot.lane.b32.xlu0 %v195, 32
    %v202 = vpop.permute.xlu0 %201
    %203 = vrot.lane.b32.xlu0 %v196, 32
    %v204 = vpop.permute.xlu0 %203
    %205 = vrot.lane.b32.xlu0 %v197, 32
    %v206 = vpop.permute.xlu0 %205
    %vm207 = vcmask 261120
    %v208 = vsel %vm207, %v202, %v204
    %v209 = vsel %vm207, %v204, %v206
    %v212 = vadd.f32 %v189, %v208
    %v213 = vadd.f32 %v190, %v209
    %vm214 = vcmp.ge.s32.totalorder %v65, 3
    %vm215 = vcmp.ge.s32.totalorder %v66, 3
    %vm216 = vcmp.le.s32.totalorder %v65, 18
    %vm217 = vcmp.le.s32.totalorder %v66, 18
    %vm218 = vmand %vm214, %vm216
    %vm219 = vmand %vm215, %vm217
    %v220 = vsel %vm218, 1, 0
    %v221 = vsel %vm219, 1, 0
    %v222 = vcvt.s32.f32 %v220
    %v223 = vcvt.s32.f32 %v221
    %v224 = vmul.f32 %v222, %v212
    %v225 = vmul.f32 %v223, %v213
    %v226 = vadd.f32 %v224, 0.0
    %v227 = vadd.f32 %v225, 0.0
    %228 = vset.pattern.permute.xlu0 1
    %229 = vperm.xlu0 %228, %v39
    %v230 = vpop.permute.xlu0 %229
    %v232 = vmul.f32 %v230, %v36
    %v233 = vmul.f32 %v230, %v37
    %v234 = vmul.f32 %v230, %v38
    %v235 = vadd.f32 %v232, 0.0
    %v236 = vadd.f32 %v233, 0.0
    %v237 = vadd.f32 %v234, 0.0
    %238 = vset.pattern.permute.xlu0 8
    %239 = vperm.xlu0 %238, %v39
    %v240 = vpop.permute.xlu0 %239
    %v242 = vmul.f32 %v240, %v36
    %v243 = vmul.f32 %v240, %v37
    %v244 = vmul.f32 %v240, %v38
    %248 = vrot.lane.b32.xlu0 %v242, 112
    %v249 = vpop.permute.xlu0 %248
    %250 = vrot.lane.b32.xlu0 %v243, 112
    %v251 = vpop.permute.xlu0 %250
    %252 = vrot.lane.b32.xlu0 %v244, 112
    %v253 = vpop.permute.xlu0 %252
    %v254 = vsel %vm92, %v249, %v251
    %v255 = vsel %vm92, %v251, %v253
    %v259 = vadd.f32 %v235, %v254
    %v260 = vadd.f32 %v236, %v255
    %v261 = vadd.f32 %v237, %v253
    %262 = vset.pattern.permute.xlu0 15
    %263 = vperm.xlu0 %262, %v39
    %v264 = vpop.permute.xlu0 %263
    %v266 = vmul.f32 %v264, %v36
    %v267 = vmul.f32 %v264, %v37
    %v268 = vmul.f32 %v264, %v38
    %272 = vrot.lane.b32.xlu0 %v266, 96
    %v273 = vpop.permute.xlu0 %272
    %274 = vrot.lane.b32.xlu0 %v267, 96
    %v275 = vpop.permute.xlu0 %274
    %276 = vrot.lane.b32.xlu0 %v268, 96
    %v277 = vpop.permute.xlu0 %276
    %v278 = vsel %vm115, %v273, %v275
    %v279 = vsel %vm115, %v275, %v277
    %v283 = vadd.f32 %v259, %v278
    %v284 = vadd.f32 %v260, %v279
    %v285 = vadd.f32 %v261, %v277
    %286 = vset.pattern.permute.xlu0 22
    %287 = vperm.xlu0 %286, %v39
    %v288 = vpop.permute.xlu0 %287
    %v290 = vmul.f32 %v288, %v36
    %v291 = vmul.f32 %v288, %v37
    %v292 = vmul.f32 %v288, %v38
    %296 = vrot.lane.b32.xlu0 %v290, 80
    %v297 = vpop.permute.xlu0 %296
    %298 = vrot.lane.b32.xlu0 %v291, 80
    %v299 = vpop.permute.xlu0 %298
    %300 = vrot.lane.b32.xlu0 %v292, 80
    %v301 = vpop.permute.xlu0 %300
    %v302 = vsel %vm138, %v297, %v299
    %v303 = vsel %vm138, %v299, %v301
    %v307 = vadd.f32 %v283, %v302
    %v308 = vadd.f32 %v284, %v303
    %v309 = vadd.f32 %v285, %v301
    %310 = vset.pattern.permute.xlu0 29
    %311 = vperm.xlu0 %310, %v39
    %v312 = vpop.permute.xlu0 %311
    %v314 = vmul.f32 %v312, %v36
    %v315 = vmul.f32 %v312, %v37
    %v316 = vmul.f32 %v312, %v38
    %320 = vrot.lane.b32.xlu0 %v314, 64
    %v321 = vpop.permute.xlu0 %320
    %322 = vrot.lane.b32.xlu0 %v315, 64
    %v323 = vpop.permute.xlu0 %322
    %324 = vrot.lane.b32.xlu0 %v316, 64
    %v325 = vpop.permute.xlu0 %324
    %v326 = vsel %vm161, %v321, %v323
    %v327 = vsel %vm161, %v323, %v325
    %v331 = vadd.f32 %v307, %v326
    %v332 = vadd.f32 %v308, %v327
    %v333 = vadd.f32 %v309, %v325
    %334 = vset.pattern.permute.xlu0 36
    %335 = vperm.xlu0 %334, %v39
    %v336 = vpop.permute.xlu0 %335
    %v338 = vmul.f32 %v336, %v36
    %v339 = vmul.f32 %v336, %v37
    %v340 = vmul.f32 %v336, %v38
    %344 = vrot.lane.b32.xlu0 %v338, 48
    %v345 = vpop.permute.xlu0 %344
    %346 = vrot.lane.b32.xlu0 %v339, 48
    %v347 = vpop.permute.xlu0 %346
    %348 = vrot.lane.b32.xlu0 %v340, 48
    %v349 = vpop.permute.xlu0 %348
    %v350 = vsel %vm184, %v345, %v347
    %v351 = vsel %vm184, %v347, %v349
    %v355 = vadd.f32 %v331, %v350
    %v356 = vadd.f32 %v332, %v351
    %v357 = vadd.f32 %v333, %v349
    %358 = vset.pattern.permute.xlu0 43
    %359 = vperm.xlu0 %358, %v39
    %v360 = vpop.permute.xlu0 %359
    %v362 = vmul.f32 %v360, %v36
    %v363 = vmul.f32 %v360, %v37
    %v364 = vmul.f32 %v360, %v38
    %368 = vrot.lane.b32.xlu0 %v362, 32
    %v369 = vpop.permute.xlu0 %368
    %370 = vrot.lane.b32.xlu0 %v363, 32
    %v371 = vpop.permute.xlu0 %370
    %372 = vrot.lane.b32.xlu0 %v364, 32
    %v373 = vpop.permute.xlu0 %372
    %v374 = vsel %vm207, %v369, %v371
    %v375 = vsel %vm207, %v371, %v373
    %v379 = vadd.f32 %v355, %v374
    %v380 = vadd.f32 %v356, %v375
    %v381 = vadd.f32 %v357, %v373
    %vm382 = vcmp.ge.s32.totalorder %v65, 2
    %vm383 = vcmp.ge.s32.totalorder %v66, 2
    %vm384 = vcmp.le.s32.totalorder %v65, 17
    %vm385 = vcmp.le.s32.totalorder %v66, 17
    %vm386 = vmand %vm382, %vm384
    %vm387 = vmand %vm383, %vm385
    %v388 = vsel %vm386, 1, 0
    %v389 = vsel %vm387, 1, 0
    %v390 = vcvt.s32.f32 %v388
    %v391 = vcvt.s32.f32 %v389
    %395 = vrot.lane.b32.xlu0 %v379, 127
    %v396 = vpop.permute.xlu0 %395
    %397 = vrot.lane.b32.xlu0 %v380, 127
    %v398 = vpop.permute.xlu0 %397
    %399 = vrot.lane.b32.xlu0 %v381, 127
    %v400 = vpop.permute.xlu0 %399
    %vm401 = vcmask 1039360
    %v402 = vsel %vm401, %v396, %v398
    %v403 = vsel %vm401, %v398, %v400
    %v406 = vmul.f32 %v390, %v402
    %v407 = vmul.f32 %v391, %v403
    %v408 = vadd.f32 %v226, %v406
    %v409 = vadd.f32 %v227, %v407
    %410 = vset.pattern.permute.xlu0 2
    %411 = vperm.xlu0 %410, %v39
    %v412 = vpop.permute.xlu0 %411
    %v414 = vmul.f32 %v412, %v36
    %v415 = vmul.f32 %v412, %v37
    %v416 = vmul.f32 %v412, %v38
    %v417 = vadd.f32 %v414, 0.0
    %v418 = vadd.f32 %v415, 0.0
    %v419 = vadd.f32 %v416, 0.0
    %420 = vset.pattern.permute.xlu0 9
    %421 = vperm.xlu0 %420, %v39
    %v422 = vpop.permute.xlu0 %421
    %v424 = vmul.f32 %v422, %v36
    %v425 = vmul.f32 %v422, %v37
    %v426 = vmul.f32 %v422, %v38
    %430 = vrot.lane.b32.xlu0 %v424, 112
    %v431 = vpop.permute.xlu0 %430
    %432 = vrot.lane.b32.xlu0 %v425, 112
    %v433 = vpop.permute.xlu0 %432
    %434 = vrot.lane.b32.xlu0 %v426, 112
    %v435 = vpop.permute.xlu0 %434
    %v436 = vsel %vm92, %v431, %v433
    %v437 = vsel %vm92, %v433, %v435
    %v441 = vadd.f32 %v417, %v436
    %v442 = vadd.f32 %v418, %v437
    %v443 = vadd.f32 %v419, %v435
    %444 = vset.pattern.permute.xlu0 16
    %445 = vperm.xlu0 %444, %v39
    %v446 = vpop.permute.xlu0 %445
    %v448 = vmul.f32 %v446, %v36
    %v449 = vmul.f32 %v446, %v37
    %v450 = vmul.f32 %v446, %v38
    %454 = vrot.lane.b32.xlu0 %v448, 96
    %v455 = vpop.permute.xlu0 %454
    %456 = vrot.lane.b32.xlu0 %v449, 96
    %v457 = vpop.permute.xlu0 %456
    %458 = vrot.lane.b32.xlu0 %v450, 96
    %v459 = vpop.permute.xlu0 %458
    %v460 = vsel %vm115, %v455, %v457
    %v461 = vsel %vm115, %v457, %v459
    %v465 = vadd.f32 %v441, %v460
    %v466 = vadd.f32 %v442, %v461
    %v467 = vadd.f32 %v443, %v459
    %468 = vset.pattern.permute.xlu0 49
    %469 = vperm.xlu0 %468, %v39
    %v470 = vpop.permute.xlu0 %469
    %v472 = vmul.f32 %v470, %v36
    %v473 = vmul.f32 %v470, %v37
    %v474 = vmul.f32 %v470, %v38
    %v475 = vadd.f32 %v472, 0.0
    %v476 = vadd.f32 %v473, 0.0
    %v477 = vadd.f32 %v474, 0.0
    %478 = vset.pattern.permute.xlu0 23
    %479 = vperm.xlu0 %478, %v39
    %v480 = vpop.permute.xlu0 %479
    %v482 = vmul.f32 %v480, %v36
    %v483 = vmul.f32 %v480, %v37
    %v484 = vmul.f32 %v480, %v38
    %488 = vrot.lane.b32.xlu0 %v482, 80
    %v489 = vpop.permute.xlu0 %488
    %490 = vrot.lane.b32.xlu0 %v483, 80
    %v491 = vpop.permute.xlu0 %490
    %492 = vrot.lane.b32.xlu0 %v484, 80
    %v493 = vpop.permute.xlu0 %492
    %v494 = vsel %vm138, %v489, %v491
    %v495 = vsel %vm138, %v491, %v493
    %v499 = vadd.f32 %v465, %v494
    %v500 = vadd.f32 %v466, %v495
    %v501 = vadd.f32 %v467, %v493
    %502 = vset.pattern.permute.xlu0 52
    %503 = vperm.xlu0 %502, %v39
    %v504 = vpop.permute.xlu0 %503
    %v506 = vmul.f32 %v504, %v36
    %v507 = vmul.f32 %v504, %v37
    %v508 = vmul.f32 %v504, %v38
    %512 = vrot.lane.b32.xlu0 %v506, 112
    %v513 = vpop.permute.xlu0 %512
    %514 = vrot.lane.b32.xlu0 %v507, 112
    %v515 = vpop.permute.xlu0 %514
    %516 = vrot.lane.b32.xlu0 %v508, 112
    %v517 = vpop.permute.xlu0 %516
    %v518 = vsel %vm92, %v513, %v515
    %v519 = vsel %vm92, %v515, %v517
    %v523 = vadd.f32 %v475, %v518
    %v524 = vadd.f32 %v476, %v519
    %v525 = vadd.f32 %v477, %v517
    %526 = vset.pattern.permute.xlu0 30
    %527 = vperm.xlu0 %526, %v39
    %v528 = vpop.permute.xlu0 %527
    %v530 = vmul.f32 %v528, %v36
    %v531 = vmul.f32 %v528, %v37
    %v532 = vmul.f32 %v528, %v38
    %536 = vrot.lane.b32.xlu0 %v530, 64
    %v537 = vpop.permute.xlu0 %536
    %538 = vrot.lane.b32.xlu0 %v531, 64
    %v539 = vpop.permute.xlu0 %538
    %540 = vrot.lane.b32.xlu0 %v532, 64
    %v541 = vpop.permute.xlu0 %540
    %v542 = vsel %vm161, %v537, %v539
    %v543 = vsel %vm161, %v539, %v541
    %v547 = vadd.f32 %v499, %v542
    %v548 = vadd.f32 %v500, %v543
    %v549 = vadd.f32 %v501, %v541
    %550 = vset.pattern.permute.xlu0 55
    %551 = vperm.xlu0 %550, %v39
    %v552 = vpop.permute.xlu0 %551
    %v554 = vmul.f32 %v552, %v36
    %v555 = vmul.f32 %v552, %v37
    %v556 = vmul.f32 %v552, %v38
    %560 = vrot.lane.b32.xlu0 %v554, 96
    %v561 = vpop.permute.xlu0 %560
    %562 = vrot.lane.b32.xlu0 %v555, 96
    %v563 = vpop.permute.xlu0 %562
    %564 = vrot.lane.b32.xlu0 %v556, 96
    %v565 = vpop.permute.xlu0 %564
    %v566 = vsel %vm115, %v561, %v563
    %v567 = vsel %vm115, %v563, %v565
    %v571 = vadd.f32 %v523, %v566
    %v572 = vadd.f32 %v524, %v567
    %v573 = vadd.f32 %v525, %v565
    %574 = vset.pattern.permute.xlu0 37
    %575 = vperm.xlu0 %574, %v39
    %v576 = vpop.permute.xlu0 %575
    %v578 = vmul.f32 %v576, %v36
    %v579 = vmul.f32 %v576, %v37
    %v580 = vmul.f32 %v576, %v38
    %584 = vrot.lane.b32.xlu0 %v578, 48
    %v585 = vpop.permute.xlu0 %584
    %586 = vrot.lane.b32.xlu0 %v579, 48
    %v587 = vpop.permute.xlu0 %586
    %588 = vrot.lane.b32.xlu0 %v580, 48
    %v589 = vpop.permute.xlu0 %588
    %v590 = vsel %vm184, %v585, %v587
    %v591 = vsel %vm184, %v587, %v589
    %v595 = vadd.f32 %v547, %v590
    %v596 = vadd.f32 %v548, %v591
    %v597 = vadd.f32 %v549, %v589
    %598 = vset.pattern.permute.xlu0 44
    %599 = vperm.xlu0 %598, %v39
    %v600 = vpop.permute.xlu0 %599
    %v602 = vmul.f32 %v600, %v36
    %v603 = vmul.f32 %v600, %v37
    %v604 = vmul.f32 %v600, %v38
    %608 = vrot.lane.b32.xlu0 %v602, 32
    %v609 = vpop.permute.xlu0 %608
    %610 = vrot.lane.b32.xlu0 %v603, 32
    %v611 = vpop.permute.xlu0 %610
    %612 = vrot.lane.b32.xlu0 %v604, 32
    %v613 = vpop.permute.xlu0 %612
    %v614 = vsel %vm207, %v609, %v611
    %v615 = vsel %vm207, %v611, %v613
    %v619 = vadd.f32 %v595, %v614
    %v620 = vadd.f32 %v596, %v615
    %v621 = vadd.f32 %v597, %v613
    %vm622 = vcmp.ge.s32.totalorder %v65, 1
    %vm623 = vcmp.ge.s32.totalorder %v66, 1
    %vm624 = vcmp.le.s32.totalorder %v65, 16
    %vm625 = vcmp.le.s32.totalorder %v66, 16
    %vm626 = vmand %vm622, %vm624
    %vm627 = vmand %vm623, %vm625
    %v628 = vsel %vm626, 1, 0
    %v629 = vsel %vm627, 1, 0
    %v630 = vcvt.s32.f32 %v628
    %v631 = vcvt.s32.f32 %v629
    %635 = vrot.lane.b32.xlu0 %v619, 126
    %v636 = vpop.permute.xlu0 %635
    %637 = vrot.lane.b32.xlu0 %v620, 126
    %v638 = vpop.permute.xlu0 %637
    %639 = vrot.lane.b32.xlu0 %v621, 126
    %v640 = vpop.permute.xlu0 %639
    %vm641 = vcmask 1031168
    %v642 = vsel %vm641, %v636, %v638
    %v643 = vsel %vm641, %v638, %v640
    %v646 = vmul.f32 %v630, %v642
    %v647 = vmul.f32 %v631, %v643
    %v648 = vadd.f32 %v408, %v646
    %v649 = vadd.f32 %v409, %v647
    %653 = vrot.lane.b32.xlu0 %v571, 94
    %v654 = vpop.permute.xlu0 %653
    %655 = vrot.lane.b32.xlu0 %v572, 94
    %v656 = vpop.permute.xlu0 %655
    %657 = vrot.lane.b32.xlu0 %v573, 94
    %v658 = vpop.permute.xlu0 %657
    %vm659 = vcmask 769024
    %v660 = vsel %vm659, %v654, %v656
    %v661 = vsel %vm659, %v656, %v658
    %v664 = vmul.f32 %v630, %v660
    %v665 = vmul.f32 %v631, %v661
    %v666 = vadd.f32 %v664, 0.0
    %v667 = vadd.f32 %v665, 0.0
    %668 = vset.pattern.permute.xlu0 3
    %669 = vperm.xlu0 %668, %v39
    %v670 = vpop.permute.xlu0 %669
    %v672 = vmul.f32 %v670, %v36
    %v673 = vmul.f32 %v670, %v37
    %v674 = vmul.f32 %v670, %v38
    %v675 = vadd.f32 %v672, 0.0
    %v676 = vadd.f32 %v673, 0.0
    %v677 = vadd.f32 %v674, 0.0
    %678 = vset.pattern.permute.xlu0 10
    %679 = vperm.xlu0 %678, %v39
    %v680 = vpop.permute.xlu0 %679
    %v682 = vmul.f32 %v680, %v36
    %v683 = vmul.f32 %v680, %v37
    %v684 = vmul.f32 %v680, %v38
    %688 = vrot.lane.b32.xlu0 %v682, 112
    %v689 = vpop.permute.xlu0 %688
    %690 = vrot.lane.b32.xlu0 %v683, 112
    %v691 = vpop.permute.xlu0 %690
    %692 = vrot.lane.b32.xlu0 %v684, 112
    %v693 = vpop.permute.xlu0 %692
    %v694 = vsel %vm92, %v689, %v691
    %v695 = vsel %vm92, %v691, %v693
    %v699 = vadd.f32 %v675, %v694
    %v700 = vadd.f32 %v676, %v695
    %v701 = vadd.f32 %v677, %v693
    %702 = vset.pattern.permute.xlu0 17
    %703 = vperm.xlu0 %702, %v39
    %v704 = vpop.permute.xlu0 %703
    %v706 = vmul.f32 %v704, %v36
    %v707 = vmul.f32 %v704, %v37
    %v708 = vmul.f32 %v704, %v38
    %712 = vrot.lane.b32.xlu0 %v706, 96
    %v713 = vpop.permute.xlu0 %712
    %714 = vrot.lane.b32.xlu0 %v707, 96
    %v715 = vpop.permute.xlu0 %714
    %716 = vrot.lane.b32.xlu0 %v708, 96
    %v717 = vpop.permute.xlu0 %716
    %v718 = vsel %vm115, %v713, %v715
    %v719 = vsel %vm115, %v715, %v717
    %v723 = vadd.f32 %v699, %v718
    %v724 = vadd.f32 %v700, %v719
    %v725 = vadd.f32 %v701, %v717
    %726 = vset.pattern.permute.xlu0 50
    %727 = vperm.xlu0 %726, %v39
    %v728 = vpop.permute.xlu0 %727
    %v730 = vmul.f32 %v728, %v36
    %v731 = vmul.f32 %v728, %v37
    %v732 = vmul.f32 %v728, %v38
    %v733 = vadd.f32 %v730, 0.0
    %v734 = vadd.f32 %v731, 0.0
    %v735 = vadd.f32 %v732, 0.0
    %736 = vset.pattern.permute.xlu0 24
    %737 = vperm.xlu0 %736, %v39
    %v738 = vpop.permute.xlu0 %737
    %v740 = vmul.f32 %v738, %v36
    %v741 = vmul.f32 %v738, %v37
    %v742 = vmul.f32 %v738, %v38
    %746 = vrot.lane.b32.xlu0 %v740, 80
    %v747 = vpop.permute.xlu0 %746
    %748 = vrot.lane.b32.xlu0 %v741, 80
    %v749 = vpop.permute.xlu0 %748
    %750 = vrot.lane.b32.xlu0 %v742, 80
    %v751 = vpop.permute.xlu0 %750
    %v752 = vsel %vm138, %v747, %v749
    %v753 = vsel %vm138, %v749, %v751
    %v757 = vadd.f32 %v723, %v752
    %v758 = vadd.f32 %v724, %v753
    %v759 = vadd.f32 %v725, %v751
    %760 = vset.pattern.permute.xlu0 53
    %761 = vperm.xlu0 %760, %v39
    %v762 = vpop.permute.xlu0 %761
    %v764 = vmul.f32 %v762, %v36
    %v765 = vmul.f32 %v762, %v37
    %v766 = vmul.f32 %v762, %v38
    %770 = vrot.lane.b32.xlu0 %v764, 112
    %v771 = vpop.permute.xlu0 %770
    %772 = vrot.lane.b32.xlu0 %v765, 112
    %v773 = vpop.permute.xlu0 %772
    %774 = vrot.lane.b32.xlu0 %v766, 112
    %v775 = vpop.permute.xlu0 %774
    %v776 = vsel %vm92, %v771, %v773
    %v777 = vsel %vm92, %v773, %v775
    %v781 = vadd.f32 %v733, %v776
    %v782 = vadd.f32 %v734, %v777
    %v783 = vadd.f32 %v735, %v775
    %784 = vset.pattern.permute.xlu0 31
    %785 = vperm.xlu0 %784, %v39
    %v786 = vpop.permute.xlu0 %785
    %v788 = vmul.f32 %v786, %v36
    %v789 = vmul.f32 %v786, %v37
    %v790 = vmul.f32 %v786, %v38
    %794 = vrot.lane.b32.xlu0 %v788, 64
    %v795 = vpop.permute.xlu0 %794
    %796 = vrot.lane.b32.xlu0 %v789, 64
    %v797 = vpop.permute.xlu0 %796
    %798 = vrot.lane.b32.xlu0 %v790, 64
    %v799 = vpop.permute.xlu0 %798
    %v800 = vsel %vm161, %v795, %v797
    %v801 = vsel %vm161, %v797, %v799
    %v805 = vadd.f32 %v757, %v800
    %v806 = vadd.f32 %v758, %v801
    %v807 = vadd.f32 %v759, %v799
    %808 = vset.pattern.permute.xlu0 56
    %809 = vperm.xlu0 %808, %v39
    %v810 = vpop.permute.xlu0 %809
    %v812 = vmul.f32 %v810, %v36
    %v813 = vmul.f32 %v810, %v37
    %v814 = vmul.f32 %v810, %v38
    %818 = vrot.lane.b32.xlu0 %v812, 96
    %v819 = vpop.permute.xlu0 %818
    %820 = vrot.lane.b32.xlu0 %v813, 96
    %v821 = vpop.permute.xlu0 %820
    %822 = vrot.lane.b32.xlu0 %v814, 96
    %v823 = vpop.permute.xlu0 %822
    %v824 = vsel %vm115, %v819, %v821
    %v825 = vsel %vm115, %v821, %v823
    %v829 = vadd.f32 %v781, %v824
    %v830 = vadd.f32 %v782, %v825
    %v831 = vadd.f32 %v783, %v823
    %832 = vset.pattern.permute.xlu0 38
    %833 = vperm.xlu0 %832, %v39
    %v834 = vpop.permute.xlu0 %833
    %v836 = vmul.f32 %v834, %v36
    %v837 = vmul.f32 %v834, %v37
    %v838 = vmul.f32 %v834, %v38
    %842 = vrot.lane.b32.xlu0 %v836, 48
    %v843 = vpop.permute.xlu0 %842
    %844 = vrot.lane.b32.xlu0 %v837, 48
    %v845 = vpop.permute.xlu0 %844
    %846 = vrot.lane.b32.xlu0 %v838, 48
    %v847 = vpop.permute.xlu0 %846
    %v848 = vsel %vm184, %v843, %v845
    %v849 = vsel %vm184, %v845, %v847
    %v853 = vadd.f32 %v805, %v848
    %v854 = vadd.f32 %v806, %v849
    %v855 = vadd.f32 %v807, %v847
    %856 = vset.pattern.permute.xlu0 45
    %857 = vperm.xlu0 %856, %v39
    %v858 = vpop.permute.xlu0 %857
    %v860 = vmul.f32 %v858, %v36
    %v861 = vmul.f32 %v858, %v37
    %v862 = vmul.f32 %v858, %v38
    %866 = vrot.lane.b32.xlu0 %v860, 32
    %v867 = vpop.permute.xlu0 %866
    %868 = vrot.lane.b32.xlu0 %v861, 32
    %v869 = vpop.permute.xlu0 %868
    %870 = vrot.lane.b32.xlu0 %v862, 32
    %v871 = vpop.permute.xlu0 %870
    %v872 = vsel %vm207, %v867, %v869
    %v873 = vsel %vm207, %v869, %v871
    %v877 = vadd.f32 %v853, %v872
    %v878 = vadd.f32 %v854, %v873
    %v879 = vadd.f32 %v855, %v871
    %883 = vrot.lane.b32.xlu0 %v877, 125
    %v884 = vpop.permute.xlu0 %883
    %885 = vrot.lane.b32.xlu0 %v878, 125
    %v886 = vpop.permute.xlu0 %885
    %887 = vrot.lane.b32.xlu0 %v879, 125
    %v888 = vpop.permute.xlu0 %887
    %vm889 = vcmask 1022976
    %v890 = vsel %vm889, %v884, %v886
    %v891 = vsel %vm889, %v886, %v888
    %v894 = vadd.f32 %v648, %v890
    %v895 = vadd.f32 %v649, %v891
    %899 = vrot.lane.b32.xlu0 %v829, 93
    %v900 = vpop.permute.xlu0 %899
    %901 = vrot.lane.b32.xlu0 %v830, 93
    %v902 = vpop.permute.xlu0 %901
    %903 = vrot.lane.b32.xlu0 %v831, 93
    %v904 = vpop.permute.xlu0 %903
    %vm905 = vcmask 760832
    %v906 = vsel %vm905, %v900, %v902
    %v907 = vsel %vm905, %v902, %v904
    %v910 = vadd.f32 %v666, %v906
    %v911 = vadd.f32 %v667, %v907
    %912 = vset.pattern.permute.xlu0 4
    %913 = vperm.xlu0 %912, %v39
    %v914 = vpop.permute.xlu0 %913
    %v916 = vmul.f32 %v914, %v36
    %v917 = vmul.f32 %v914, %v37
    %v918 = vmul.f32 %v914, %v38
    %v919 = vadd.f32 %v916, 0.0
    %v920 = vadd.f32 %v917, 0.0
    %v921 = vadd.f32 %v918, 0.0
    %922 = vset.pattern.permute.xlu0 11
    %923 = vperm.xlu0 %922, %v39
    %v924 = vpop.permute.xlu0 %923
    %v926 = vmul.f32 %v924, %v36
    %v927 = vmul.f32 %v924, %v37
    %v928 = vmul.f32 %v924, %v38
    %932 = vrot.lane.b32.xlu0 %v926, 112
    %v933 = vpop.permute.xlu0 %932
    %934 = vrot.lane.b32.xlu0 %v927, 112
    %v935 = vpop.permute.xlu0 %934
    %936 = vrot.lane.b32.xlu0 %v928, 112
    %v937 = vpop.permute.xlu0 %936
    %v938 = vsel %vm92, %v933, %v935
    %v939 = vsel %vm92, %v935, %v937
    %v943 = vadd.f32 %v919, %v938
    %v944 = vadd.f32 %v920, %v939
    %v945 = vadd.f32 %v921, %v937
    %946 = vset.pattern.permute.xlu0 18
    %947 = vperm.xlu0 %946, %v39
    %v948 = vpop.permute.xlu0 %947
    %v950 = vmul.f32 %v948, %v36
    %v951 = vmul.f32 %v948, %v37
    %v952 = vmul.f32 %v948, %v38
    %956 = vrot.lane.b32.xlu0 %v950, 96
    %v957 = vpop.permute.xlu0 %956
    %958 = vrot.lane.b32.xlu0 %v951, 96
    %v959 = vpop.permute.xlu0 %958
    %960 = vrot.lane.b32.xlu0 %v952, 96
    %v961 = vpop.permute.xlu0 %960
    %v962 = vsel %vm115, %v957, %v959
    %v963 = vsel %vm115, %v959, %v961
    %v967 = vadd.f32 %v943, %v962
    %v968 = vadd.f32 %v944, %v963
    %v969 = vadd.f32 %v945, %v961
    %970 = vset.pattern.permute.xlu0 51
    %971 = vperm.xlu0 %970, %v39
    %v972 = vpop.permute.xlu0 %971
    %v974 = vmul.f32 %v972, %v36
    %v975 = vmul.f32 %v972, %v37
    %v976 = vmul.f32 %v972, %v38
    %v977 = vadd.f32 %v974, 0.0
    %v978 = vadd.f32 %v975, 0.0
    %v979 = vadd.f32 %v976, 0.0
    %980 = vset.pattern.permute.xlu0 25
    %981 = vperm.xlu0 %980, %v39
    %v982 = vpop.permute.xlu0 %981
    %v984 = vmul.f32 %v982, %v36
    %v985 = vmul.f32 %v982, %v37
    %v986 = vmul.f32 %v982, %v38
    %990 = vrot.lane.b32.xlu0 %v984, 80
    %v991 = vpop.permute.xlu0 %990
    %992 = vrot.lane.b32.xlu0 %v985, 80
    %v993 = vpop.permute.xlu0 %992
    %994 = vrot.lane.b32.xlu0 %v986, 80
    %v995 = vpop.permute.xlu0 %994
    %v996 = vsel %vm138, %v991, %v993
    %v997 = vsel %vm138, %v993, %v995
    %v1001 = vadd.f32 %v967, %v996
    %v1002 = vadd.f32 %v968, %v997
    %v1003 = vadd.f32 %v969, %v995
    %1004 = vset.pattern.permute.xlu0 54
    %1005 = vperm.xlu0 %1004, %v39
    %v1006 = vpop.permute.xlu0 %1005
    %v1008 = vmul.f32 %v1006, %v36
    %v1009 = vmul.f32 %v1006, %v37
    %v1010 = vmul.f32 %v1006, %v38
    %1014 = vrot.lane.b32.xlu0 %v1008, 112
    %v1015 = vpop.permute.xlu0 %1014
    %1016 = vrot.lane.b32.xlu0 %v1009, 112
    %v1017 = vpop.permute.xlu0 %1016
    %1018 = vrot.lane.b32.xlu0 %v1010, 112
    %v1019 = vpop.permute.xlu0 %1018
    %v1020 = vsel %vm92, %v1015, %v1017
    %v1021 = vsel %vm92, %v1017, %v1019
    %v1025 = vadd.f32 %v977, %v1020
    %v1026 = vadd.f32 %v978, %v1021
    %v1027 = vadd.f32 %v979, %v1019
    %1028 = vset.pattern.permute.xlu0 32
    %1029 = vperm.xlu0 %1028, %v39
    %v1030 = vpop.permute.xlu0 %1029
    %v1032 = vmul.f32 %v1030, %v36
    %v1033 = vmul.f32 %v1030, %v37
    %v1034 = vmul.f32 %v1030, %v38
    %1038 = vrot.lane.b32.xlu0 %v1032, 64
    %v1039 = vpop.permute.xlu0 %1038
    %1040 = vrot.lane.b32.xlu0 %v1033, 64
    %v1041 = vpop.permute.xlu0 %1040
    %1042 = vrot.lane.b32.xlu0 %v1034, 64
    %v1043 = vpop.permute.xlu0 %1042
    %v1044 = vsel %vm161, %v1039, %v1041
    %v1045 = vsel %vm161, %v1041, %v1043
    %v1049 = vadd.f32 %v1001, %v1044
    %v1050 = vadd.f32 %v1002, %v1045
    %v1051 = vadd.f32 %v1003, %v1043
    %1052 = vset.pattern.permute.xlu0 57
    %1053 = vperm.xlu0 %1052, %v39
    %v1054 = vpop.permute.xlu0 %1053
    %v1056 = vmul.f32 %v1054, %v36
    %v1057 = vmul.f32 %v1054, %v37
    %v1058 = vmul.f32 %v1054, %v38
    %1062 = vrot.lane.b32.xlu0 %v1056, 96
    %v1063 = vpop.permute.xlu0 %1062
    %1064 = vrot.lane.b32.xlu0 %v1057, 96
    %v1065 = vpop.permute.xlu0 %1064
    %1066 = vrot.lane.b32.xlu0 %v1058, 96
    %v1067 = vpop.permute.xlu0 %1066
    %v1068 = vsel %vm115, %v1063, %v1065
    %v1069 = vsel %vm115, %v1065, %v1067
    %v1073 = vadd.f32 %v1025, %v1068
    %v1074 = vadd.f32 %v1026, %v1069
    %v1075 = vadd.f32 %v1027, %v1067
    %1076 = vset.pattern.permute.xlu0 39
    %1077 = vperm.xlu0 %1076, %v39
    %v1078 = vpop.permute.xlu0 %1077
    %v1080 = vmul.f32 %v1078, %v36
    %v1081 = vmul.f32 %v1078, %v37
    %v1082 = vmul.f32 %v1078, %v38
    %1086 = vrot.lane.b32.xlu0 %v1080, 48
    %v1087 = vpop.permute.xlu0 %1086
    %1088 = vrot.lane.b32.xlu0 %v1081, 48
    %v1089 = vpop.permute.xlu0 %1088
    %1090 = vrot.lane.b32.xlu0 %v1082, 48
    %v1091 = vpop.permute.xlu0 %1090
    %v1092 = vsel %vm184, %v1087, %v1089
    %v1093 = vsel %vm184, %v1089, %v1091
    %v1097 = vadd.f32 %v1049, %v1092
    %v1098 = vadd.f32 %v1050, %v1093
    %v1099 = vadd.f32 %v1051, %v1091
    %1100 = vset.pattern.permute.xlu0 46
    %1101 = vperm.xlu0 %1100, %v39
    %v1102 = vpop.permute.xlu0 %1101
    %v1104 = vmul.f32 %v1102, %v36
    %v1105 = vmul.f32 %v1102, %v37
    %v1106 = vmul.f32 %v1102, %v38
    %1110 = vrot.lane.b32.xlu0 %v1104, 32
    %v1111 = vpop.permute.xlu0 %1110
    %1112 = vrot.lane.b32.xlu0 %v1105, 32
    %v1113 = vpop.permute.xlu0 %1112
    %1114 = vrot.lane.b32.xlu0 %v1106, 32
    %v1115 = vpop.permute.xlu0 %1114
    %v1116 = vsel %vm207, %v1111, %v1113
    %v1117 = vsel %vm207, %v1113, %v1115
    %v1121 = vadd.f32 %v1097, %v1116
    %v1122 = vadd.f32 %v1098, %v1117
    %v1123 = vadd.f32 %v1099, %v1115
    %vm1124 = vcmp.ge.s32.totalorder %v65, 4294967295
    %vm1125 = vcmp.ge.s32.totalorder %v66, 4294967295
    %vm1126 = vcmp.le.s32.totalorder %v65, 14
    %vm1127 = vcmp.le.s32.totalorder %v66, 14
    %vm1128 = vmand %vm1124, %vm1126
    %vm1129 = vmand %vm1125, %vm1127
    %v1130 = vsel %vm1128, 1, 0
    %v1131 = vsel %vm1129, 1, 0
    %v1132 = vcvt.s32.f32 %v1130
    %v1133 = vcvt.s32.f32 %v1131
    %1137 = vrot.lane.b32.xlu0 %v1121, 124
    %v1138 = vpop.permute.xlu0 %1137
    %1139 = vrot.lane.b32.xlu0 %v1122, 124
    %v1140 = vpop.permute.xlu0 %1139
    %1141 = vrot.lane.b32.xlu0 %v1123, 124
    %v1142 = vpop.permute.xlu0 %1141
    %vm1143 = vcmask 1014784
    %v1144 = vsel %vm1143, %v1138, %v1140
    %v1145 = vsel %vm1143, %v1140, %v1142
    %v1148 = vmul.f32 %v1132, %v1144
    %v1149 = vmul.f32 %v1133, %v1145
    %v1150 = vadd.f32 %v894, %v1148
    %v1151 = vadd.f32 %v895, %v1149
    %1155 = vrot.lane.b32.xlu0 %v1073, 92
    %v1156 = vpop.permute.xlu0 %1155
    %1157 = vrot.lane.b32.xlu0 %v1074, 92
    %v1158 = vpop.permute.xlu0 %1157
    %1159 = vrot.lane.b32.xlu0 %v1075, 92
    %v1160 = vpop.permute.xlu0 %1159
    %vm1161 = vcmask 752640
    %v1162 = vsel %vm1161, %v1156, %v1158
    %v1163 = vsel %vm1161, %v1158, %v1160
    %v1166 = vmul.f32 %v1132, %v1162
    %v1167 = vmul.f32 %v1133, %v1163
    %v1168 = vadd.f32 %v910, %v1166
    %v1169 = vadd.f32 %v911, %v1167
    %1170 = vset.pattern.permute.xlu0 5
    %1171 = vperm.xlu0 %1170, %v39
    %v1172 = vpop.permute.xlu0 %1171
    %v1174 = vmul.f32 %v1172, %v36
    %v1175 = vmul.f32 %v1172, %v37
    %v1176 = vmul.f32 %v1172, %v38
    %v1177 = vadd.f32 %v1174, 0.0
    %v1178 = vadd.f32 %v1175, 0.0
    %v1179 = vadd.f32 %v1176, 0.0
    %1180 = vset.pattern.permute.xlu0 12
    %1181 = vperm.xlu0 %1180, %v39
    %v1182 = vpop.permute.xlu0 %1181
    %v1184 = vmul.f32 %v1182, %v36
    %v1185 = vmul.f32 %v1182, %v37
    %v1186 = vmul.f32 %v1182, %v38
    %1190 = vrot.lane.b32.xlu0 %v1184, 112
    %v1191 = vpop.permute.xlu0 %1190
    %1192 = vrot.lane.b32.xlu0 %v1185, 112
    %v1193 = vpop.permute.xlu0 %1192
    %1194 = vrot.lane.b32.xlu0 %v1186, 112
    %v1195 = vpop.permute.xlu0 %1194
    %v1196 = vsel %vm92, %v1191, %v1193
    %v1197 = vsel %vm92, %v1193, %v1195
    %v1201 = vadd.f32 %v1177, %v1196
    %v1202 = vadd.f32 %v1178, %v1197
    %v1203 = vadd.f32 %v1179, %v1195
    %1204 = vset.pattern.permute.xlu0 19
    %1205 = vperm.xlu0 %1204, %v39
    %v1206 = vpop.permute.xlu0 %1205
    %v1208 = vmul.f32 %v1206, %v36
    %v1209 = vmul.f32 %v1206, %v37
    %v1210 = vmul.f32 %v1206, %v38
    %1214 = vrot.lane.b32.xlu0 %v1208, 96
    %v1215 = vpop.permute.xlu0 %1214
    %1216 = vrot.lane.b32.xlu0 %v1209, 96
    %v1217 = vpop.permute.xlu0 %1216
    %1218 = vrot.lane.b32.xlu0 %v1210, 96
    %v1219 = vpop.permute.xlu0 %1218
    %v1220 = vsel %vm115, %v1215, %v1217
    %v1221 = vsel %vm115, %v1217, %v1219
    %v1225 = vadd.f32 %v1201, %v1220
    %v1226 = vadd.f32 %v1202, %v1221
    %v1227 = vadd.f32 %v1203, %v1219
    %1228 = vset.pattern.permute.xlu0 26
    %1229 = vperm.xlu0 %1228, %v39
    %v1230 = vpop.permute.xlu0 %1229
    %v1232 = vmul.f32 %v1230, %v36
    %v1233 = vmul.f32 %v1230, %v37
    %v1234 = vmul.f32 %v1230, %v38
    %1238 = vrot.lane.b32.xlu0 %v1232, 80
    %v1239 = vpop.permute.xlu0 %1238
    %1240 = vrot.lane.b32.xlu0 %v1233, 80
    %v1241 = vpop.permute.xlu0 %1240
    %1242 = vrot.lane.b32.xlu0 %v1234, 80
    %v1243 = vpop.permute.xlu0 %1242
    %v1244 = vsel %vm138, %v1239, %v1241
    %v1245 = vsel %vm138, %v1241, %v1243
    %v1249 = vadd.f32 %v1225, %v1244
    %v1250 = vadd.f32 %v1226, %v1245
    %v1251 = vadd.f32 %v1227, %v1243
    %1252 = vset.pattern.permute.xlu0 33
    %1253 = vperm.xlu0 %1252, %v39
    %v1254 = vpop.permute.xlu0 %1253
    %v1256 = vmul.f32 %v1254, %v36
    %v1257 = vmul.f32 %v1254, %v37
    %v1258 = vmul.f32 %v1254, %v38
    %1262 = vrot.lane.b32.xlu0 %v1256, 64
    %v1263 = vpop.permute.xlu0 %1262
    %1264 = vrot.lane.b32.xlu0 %v1257, 64
    %v1265 = vpop.permute.xlu0 %1264
    %1266 = vrot.lane.b32.xlu0 %v1258, 64
    %v1267 = vpop.permute.xlu0 %1266
    %v1268 = vsel %vm161, %v1263, %v1265
    %v1269 = vsel %vm161, %v1265, %v1267
    %v1273 = vadd.f32 %v1249, %v1268
    %v1274 = vadd.f32 %v1250, %v1269
    %v1275 = vadd.f32 %v1251, %v1267
    %1276 = vset.pattern.permute.xlu0 40
    %1277 = vperm.xlu0 %1276, %v39
    %v1278 = vpop.permute.xlu0 %1277
    %v1280 = vmul.f32 %v1278, %v36
    %v1281 = vmul.f32 %v1278, %v37
    %v1282 = vmul.f32 %v1278, %v38
    %1286 = vrot.lane.b32.xlu0 %v1280, 48
    %v1287 = vpop.permute.xlu0 %1286
    %1288 = vrot.lane.b32.xlu0 %v1281, 48
    %v1289 = vpop.permute.xlu0 %1288
    %1290 = vrot.lane.b32.xlu0 %v1282, 48
    %v1291 = vpop.permute.xlu0 %1290
    %v1292 = vsel %vm184, %v1287, %v1289
    %v1293 = vsel %vm184, %v1289, %v1291
    %v1297 = vadd.f32 %v1273, %v1292
    %v1298 = vadd.f32 %v1274, %v1293
    %v1299 = vadd.f32 %v1275, %v1291
    %1300 = vset.pattern.permute.xlu0 47
    %1301 = vperm.xlu0 %1300, %v39
    %v1302 = vpop.permute.xlu0 %1301
    %v1304 = vmul.f32 %v1302, %v36
    %v1305 = vmul.f32 %v1302, %v37
    %v1306 = vmul.f32 %v1302, %v38
    %1310 = vrot.lane.b32.xlu0 %v1304, 32
    %v1311 = vpop.permute.xlu0 %1310
    %1312 = vrot.lane.b32.xlu0 %v1305, 32
    %v1313 = vpop.permute.xlu0 %1312
    %1314 = vrot.lane.b32.xlu0 %v1306, 32
    %v1315 = vpop.permute.xlu0 %1314
    %v1316 = vsel %vm207, %v1311, %v1313
    %v1317 = vsel %vm207, %v1313, %v1315
    %v1321 = vadd.f32 %v1297, %v1316
    %v1322 = vadd.f32 %v1298, %v1317
    %v1323 = vadd.f32 %v1299, %v1315
    %vm1324 = vcmp.ge.s32.totalorder %v65, 4294967294
    %vm1325 = vcmp.ge.s32.totalorder %v66, 4294967294
    %vm1326 = vcmp.le.s32.totalorder %v65, 13
    %vm1327 = vcmp.le.s32.totalorder %v66, 13
    %vm1328 = vmand %vm1324, %vm1326
    %vm1329 = vmand %vm1325, %vm1327
    %v1330 = vsel %vm1328, 1, 0
    %v1331 = vsel %vm1329, 1, 0
    %v1332 = vcvt.s32.f32 %v1330
    %v1333 = vcvt.s32.f32 %v1331
    %1337 = vrot.lane.b32.xlu0 %v1321, 123
    %v1338 = vpop.permute.xlu0 %1337
    %1339 = vrot.lane.b32.xlu0 %v1322, 123
    %v1340 = vpop.permute.xlu0 %1339
    %1341 = vrot.lane.b32.xlu0 %v1323, 123
    %v1342 = vpop.permute.xlu0 %1341
    %vm1343 = vcmask 1006592
    %v1344 = vsel %vm1343, %v1338, %v1340
    %v1345 = vsel %vm1343, %v1340, %v1342
    %v1348 = vmul.f32 %v1332, %v1344
    %v1349 = vmul.f32 %v1333, %v1345
    %v1350 = vadd.f32 %v1150, %v1348
    %v1351 = vadd.f32 %v1151, %v1349
    %1352 = vset.pattern.permute.xlu0 6
    %1353 = vperm.xlu0 %1352, %v39
    %v1354 = vpop.permute.xlu0 %1353
    %v1356 = vmul.f32 %v1354, %v36
    %v1357 = vmul.f32 %v1354, %v37
    %v1358 = vmul.f32 %v1354, %v38
    %v1359 = vadd.f32 %v1356, 0.0
    %v1360 = vadd.f32 %v1357, 0.0
    %v1361 = vadd.f32 %v1358, 0.0
    %1362 = vset.pattern.permute.xlu0 13
    %1363 = vperm.xlu0 %1362, %v39
    %v1364 = vpop.permute.xlu0 %1363
    %v1366 = vmul.f32 %v1364, %v36
    %v1367 = vmul.f32 %v1364, %v37
    %v1368 = vmul.f32 %v1364, %v38
    %1372 = vrot.lane.b32.xlu0 %v1366, 112
    %v1373 = vpop.permute.xlu0 %1372
    %1374 = vrot.lane.b32.xlu0 %v1367, 112
    %v1375 = vpop.permute.xlu0 %1374
    %1376 = vrot.lane.b32.xlu0 %v1368, 112
    %v1377 = vpop.permute.xlu0 %1376
    %v1378 = vsel %vm92, %v1373, %v1375
    %v1379 = vsel %vm92, %v1375, %v1377
    %v1383 = vadd.f32 %v1359, %v1378
    %v1384 = vadd.f32 %v1360, %v1379
    %v1385 = vadd.f32 %v1361, %v1377
    %1386 = vset.pattern.permute.xlu0 20
    %1387 = vperm.xlu0 %1386, %v39
    %v1388 = vpop.permute.xlu0 %1387
    %v1390 = vmul.f32 %v1388, %v36
    %v1391 = vmul.f32 %v1388, %v37
    %v1392 = vmul.f32 %v1388, %v38
    %1396 = vrot.lane.b32.xlu0 %v1390, 96
    %v1397 = vpop.permute.xlu0 %1396
    %1398 = vrot.lane.b32.xlu0 %v1391, 96
    %v1399 = vpop.permute.xlu0 %1398
    %1400 = vrot.lane.b32.xlu0 %v1392, 96
    %v1401 = vpop.permute.xlu0 %1400
    %v1402 = vsel %vm115, %v1397, %v1399
    %v1403 = vsel %vm115, %v1399, %v1401
    %v1407 = vadd.f32 %v1383, %v1402
    %v1408 = vadd.f32 %v1384, %v1403
    %v1409 = vadd.f32 %v1385, %v1401
    %1410 = vset.pattern.permute.xlu0 27
    %1411 = vperm.xlu0 %1410, %v39
    %v1412 = vpop.permute.xlu0 %1411
    %v1414 = vmul.f32 %v1412, %v36
    %v1415 = vmul.f32 %v1412, %v37
    %v1416 = vmul.f32 %v1412, %v38
    %1420 = vrot.lane.b32.xlu0 %v1414, 80
    %v1421 = vpop.permute.xlu0 %1420
    %1422 = vrot.lane.b32.xlu0 %v1415, 80
    %v1423 = vpop.permute.xlu0 %1422
    %1424 = vrot.lane.b32.xlu0 %v1416, 80
    %v1425 = vpop.permute.xlu0 %1424
    %v1426 = vsel %vm138, %v1421, %v1423
    %v1427 = vsel %vm138, %v1423, %v1425
    %v1431 = vadd.f32 %v1407, %v1426
    %v1432 = vadd.f32 %v1408, %v1427
    %v1433 = vadd.f32 %v1409, %v1425
    %1434 = vset.pattern.permute.xlu0 34
    %1435 = vperm.xlu0 %1434, %v39
    %v1436 = vpop.permute.xlu0 %1435
    %v1438 = vmul.f32 %v1436, %v36
    %v1439 = vmul.f32 %v1436, %v37
    %v1440 = vmul.f32 %v1436, %v38
    %1444 = vrot.lane.b32.xlu0 %v1438, 64
    %v1445 = vpop.permute.xlu0 %1444
    %1446 = vrot.lane.b32.xlu0 %v1439, 64
    %v1447 = vpop.permute.xlu0 %1446
    %1448 = vrot.lane.b32.xlu0 %v1440, 64
    %v1449 = vpop.permute.xlu0 %1448
    %v1450 = vsel %vm161, %v1445, %v1447
    %v1451 = vsel %vm161, %v1447, %v1449
    %v1455 = vadd.f32 %v1431, %v1450
    %v1456 = vadd.f32 %v1432, %v1451
    %v1457 = vadd.f32 %v1433, %v1449
    %1458 = vset.pattern.permute.xlu0 41
    %1459 = vperm.xlu0 %1458, %v39
    %v1460 = vpop.permute.xlu0 %1459
    %v1462 = vmul.f32 %v1460, %v36
    %v1463 = vmul.f32 %v1460, %v37
    %v1464 = vmul.f32 %v1460, %v38
    %1468 = vrot.lane.b32.xlu0 %v1462, 48
    %v1469 = vpop.permute.xlu0 %1468
    %1470 = vrot.lane.b32.xlu0 %v1463, 48
    %v1471 = vpop.permute.xlu0 %1470
    %1472 = vrot.lane.b32.xlu0 %v1464, 48
    %v1473 = vpop.permute.xlu0 %1472
    %v1474 = vsel %vm184, %v1469, %v1471
    %v1475 = vsel %vm184, %v1471, %v1473
    %v1479 = vadd.f32 %v1455, %v1474
    %v1480 = vadd.f32 %v1456, %v1475
    %v1481 = vadd.f32 %v1457, %v1473
    %1482 = vset.pattern.permute.xlu0 48
    %1483 = vperm.xlu0 %1482, %v39
    %v1484 = vpop.permute.xlu0 %1483
    %v1486 = vmul.f32 %v1484, %v36
    %v1487 = vmul.f32 %v1484, %v37
    %v1488 = vmul.f32 %v1484, %v38
    %1492 = vrot.lane.b32.xlu0 %v1486, 32
    %v1493 = vpop.permute.xlu0 %1492
    %1494 = vrot.lane.b32.xlu0 %v1487, 32
    %v1495 = vpop.permute.xlu0 %1494
    %1496 = vrot.lane.b32.xlu0 %v1488, 32
    %v1497 = vpop.permute.xlu0 %1496
    %v1498 = vsel %vm207, %v1493, %v1495
    %v1499 = vsel %vm207, %v1495, %v1497
    %v1503 = vadd.f32 %v1479, %v1498
    %v1504 = vadd.f32 %v1480, %v1499
    %v1505 = vadd.f32 %v1481, %v1497
    %vm1506 = vcmp.ge.s32.totalorder %v65, 4294967293
    %vm1507 = vcmp.ge.s32.totalorder %v66, 4294967293
    %vm1508 = vcmp.le.s32.totalorder %v65, 12
    %vm1509 = vcmp.le.s32.totalorder %v66, 12
    %vm1510 = vmand %vm1506, %vm1508
    %vm1511 = vmand %vm1507, %vm1509
    %v1512 = vsel %vm1510, 1, 0
    %v1513 = vsel %vm1511, 1, 0
    %v1514 = vcvt.s32.f32 %v1512
    %v1515 = vcvt.s32.f32 %v1513
    %1519 = vrot.lane.b32.xlu0 %v1503, 122
    %v1520 = vpop.permute.xlu0 %1519
    %1521 = vrot.lane.b32.xlu0 %v1504, 122
    %v1522 = vpop.permute.xlu0 %1521
    %1523 = vrot.lane.b32.xlu0 %v1505, 122
    %v1524 = vpop.permute.xlu0 %1523
    %vm1525 = vcmask 998400
    %v1526 = vsel %vm1525, %v1520, %v1522
    %v1527 = vsel %vm1525, %v1522, %v1524
    %v1530 = vmul.f32 %v1514, %v1526
    %v1531 = vmul.f32 %v1515, %v1527
    %v1532 = vadd.f32 %v1350, %v1530
    %v1533 = vadd.f32 %v1351, %v1531
    %1534 = vrot.lane.b32.xlu0 %v39, 67
    %v1535 = vpop.permute.xlu0 %1534
    %vm1536 = vcmask 64512
    %v1537 = vsel %vm1536, %v1535, 0
    %1539 = vmatprep.subr.mxu0 %v1169
    %1540 = vmatpush1.msra.mxu0 %v1168
    %1541 = vmatprep.subr.mxu0 0.0
    %1542 = vmatpush1.msra.mxu0 0.0
    %1543 = vmatprep.subr.mxu0 0.0
    %1544 = vmatpush1.msra.mxu0 0.0
    %1545 = vmatprep.subr.mxu0 0.0
    %1546 = vmatpush1.msra.mxu0 0.0
    %1547 = vmatprep.subr.mxu0 0.0
    %1548 = vmatpush1.msra.mxu0 0.0
    %1549 = vmatprep.subr.mxu0 0.0
    %1550 = vmatpush1.msra.mxu0 0.0
    %1551 = vmatprep.subr.mxu0 0.0
    %1552 = vmatpush1.msra.mxu0 0.0
    %1553 = vmatprep.subr.mxu0 0.0
    %1554 = vmatpush1.msra.mxu0 0.0
    %1555 = vmatprep.subr.mxu0 0.0
    %1556 = vmatpush1.msra.mxu0 0.0
    %1557 = vmatprep.subr.mxu0 0.0
    %1558 = vmatpush1.msra.mxu0 0.0
    %1559 = vmatprep.subr.mxu0 0.0
    %1560 = vmatpush1.msra.mxu0 0.0
    %1561 = vmatprep.subr.mxu0 0.0
    %1562 = vmatpush1.msra.mxu0 0.0
    %1563 = vmatprep.subr.mxu0 0.0
    %1564 = vmatpush1.msra.mxu0 0.0
    %1565 = vmatprep.subr.mxu0 0.0
    %1566 = vmatpush1.msra.mxu0 0.0
    %1567 = vmatprep.subr.mxu0 0.0
    %1568 = vmatpush1.msra.mxu0 0.0
    %1569 = vmatprep.subr.mxu0 0.0
    %1570 = vmatpush1.msra.mxu0 0.0
    %1571 = vmatprep.subr.mxu0 0.0
    %1572 = vmatpush1.msra.mxu0 0.0
    %1573 = vmatprep.subr.mxu0 0.0
    %1574 = vmatpush1.msra.mxu0 0.0
    %1575 = vmatprep.subr.mxu0 0.0
    %1576 = vmatpush1.msra.mxu0 0.0
    %1577 = vmatprep.subr.mxu0 0.0
    %1578 = vmatpush1.msra.mxu0 0.0
    %1579 = vmatprep.subr.mxu0 0.0
    %1580 = vmatpush1.msra.mxu0 0.0
    %1581 = vmatprep.subr.mxu0 0.0
    %1582 = vmatpush1.msra.mxu0 0.0
    %1583 = vmatprep.subr.mxu0 0.0
    %1584 = vmatpush1.msra.mxu0 0.0
    %1585 = vmatprep.subr.mxu0 0.0
    %1586 = vmatpush1.msra.mxu0 0.0
    %1587 = vmatprep.subr.mxu0 0.0
    %1588 = vmatpush1.msra.mxu0 0.0
    %1589 = vmatprep.subr.mxu0 0.0
    %1590 = vmatpush1.msra.mxu0 0.0
    %1591 = vmatprep.subr.mxu0 0.0
    %1592 = vmatpush1.msra.mxu0 0.0
    %1593 = vmatprep.subr.mxu0 0.0
    %1594 = vmatpush1.msra.mxu0 0.0
    %1595 = vmatprep.subr.mxu0 0.0
    %1596 = vmatpush1.msra.mxu0 0.0
    %1597 = vmatprep.subr.mxu0 0.0
    %1598 = vmatpush1.msra.mxu0 0.0
    %1599 = vmatprep.subr.mxu0 0.0
    %1600 = vmatpush1.msra.mxu0 0.0
    %1601 = vmatprep.subr.mxu0 0.0
    %1602 = vmatpush1.msra.mxu0 0.0
    %1603 = vmatprep.mubr.f32.mxu0 0.0
    %1604 = vmatmul.mubr.f32.gmra.mrb[0].mxu0 %v1537
    %v1605 = vpop.f32.mrb[0].mxu0
    %v1606 = vadd.f32 %v1532, %v1605
    %v1607 = vpop.f32.mrb[0].mxu0
    %v1608 = vadd.f32 %v1533, %v1607
    %1609 = vdwg.mxu0
    %1613 = vrot.lane.b32.xlu0 %v36, 77
    %v1614 = vpop.permute.xlu0 %1613
    %1615 = vrot.lane.b32.xlu0 %v37, 77
    %v1616 = vpop.permute.xlu0 %1615
    %1617 = vrot.lane.b32.xlu0 %v38, 77
    %v1618 = vpop.permute.xlu0 %1617
    %vm1619 = vcmask 629760
    %v1620 = vsel %vm1619, %v1614, %v1616
    %v1621 = vsel %vm1619, %v1616, %v1618
    %v1624 = vadd.f32 %v1606, %v1620
    %v1625 = vadd.f32 %v1608, %v1621
    %1626 = vset.pattern.permute.xlu0 58
    %1627 = vperm.xlu0 %1626, %v39
    %v1628 = vpop.permute.xlu0 %1627
    %v1630 = vadd.f32 %v1624, %v1628
    %v1631 = vadd.f32 %v1625, %v1628
    %1632 = vrot.lane.b32.xlu0 %v39, 59
    %v1633 = vpop.permute.xlu0 %1632
    %v1634 = vsel %vm1536, %v1633, 0
    %v1636 = vand.u32 %v1631, 4294901760
    %1637 = vmatprep.subr.mxu0 %v1636
    %v1638 = vand.u32 %v1630, 4294901760
    %1639 = vmatpush1.msra.mxu0 %v1638
    %1640 = vmatprep.subr.mxu0 0.0
    %1641 = vmatpush1.msra.mxu0 0.0
    %1642 = vmatprep.subr.mxu0 0.0
    %1643 = vmatpush1.msra.mxu0 0.0
    %1644 = vmatprep.subr.mxu0 0.0
    %1645 = vmatpush1.msra.mxu0 0.0
    %1646 = vmatprep.subr.mxu0 0.0
    %1647 = vmatpush1.msra.mxu0 0.0
    %1648 = vmatprep.subr.mxu0 0.0
    %1649 = vmatpush1.msra.mxu0 0.0
    %1650 = vmatprep.subr.mxu0 0.0
    %1651 = vmatpush1.msra.mxu0 0.0
    %1652 = vmatprep.subr.mxu0 0.0
    %1653 = vmatpush1.msra.mxu0 0.0
    %1654 = vmatprep.subr.mxu0 0.0
    %1655 = vmatpush1.msra.mxu0 0.0
    %1656 = vmatprep.subr.mxu0 0.0
    %1657 = vmatpush1.msra.mxu0 0.0
    %1658 = vmatprep.subr.mxu0 0.0
    %1659 = vmatpush1.msra.mxu0 0.0
    %1660 = vmatprep.subr.mxu0 0.0
    %1661 = vmatpush1.msra.mxu0 0.0
    %1662 = vmatprep.subr.mxu0 0.0
    %1663 = vmatpush1.msra.mxu0 0.0
    %1664 = vmatprep.subr.mxu0 0.0
    %1665 = vmatpush1.msra.mxu0 0.0
    %1666 = vmatprep.subr.mxu0 0.0
    %1667 = vmatpush1.msra.mxu0 0.0
    %1668 = vmatprep.subr.mxu0 0.0
    %1669 = vmatpush1.msra.mxu0 0.0
    %1670 = vmatprep.subr.mxu0 0.0
    %1671 = vmatpush1.msra.mxu0 0.0
    %1672 = vmatprep.subr.mxu0 0.0
    %1673 = vmatpush1.msra.mxu0 0.0
    %1674 = vmatprep.subr.mxu0 0.0
    %1675 = vmatpush1.msra.mxu0 0.0
    %1676 = vmatprep.subr.mxu0 0.0
    %1677 = vmatpush1.msra.mxu0 0.0
    %1678 = vmatprep.subr.mxu0 0.0
    %1679 = vmatpush1.msra.mxu0 0.0
    %1680 = vmatprep.subr.mxu0 0.0
    %1681 = vmatpush1.msra.mxu0 0.0
    %1682 = vmatprep.subr.mxu0 0.0
    %1683 = vmatpush1.msra.mxu0 0.0
    %1684 = vmatprep.subr.mxu0 0.0
    %1685 = vmatpush1.msra.mxu0 0.0
    %1686 = vmatprep.subr.mxu0 0.0
    %1687 = vmatpush1.msra.mxu0 0.0
    %1688 = vmatprep.subr.mxu0 0.0
    %1689 = vmatpush1.msra.mxu0 0.0
    %1690 = vmatprep.subr.mxu0 0.0
    %1691 = vmatpush1.msra.mxu0 0.0
    %1692 = vmatprep.subr.mxu0 0.0
    %1693 = vmatpush1.msra.mxu0 0.0
    %1694 = vmatprep.subr.mxu0 0.0
    %1695 = vmatpush1.msra.mxu0 0.0
    %1696 = vmatprep.subr.mxu0 0.0
    %1697 = vmatpush1.msra.mxu0 0.0
    %1698 = vmatprep.subr.mxu0 0.0
    %1699 = vmatpush1.msra.mxu0 0.0
    %1700 = vmatprep.subr.mxu0 0.0
    %1701 = vmatpush1.msra.mxu0 0.0
    %1702 = vmatprep.mubr.f32.mxu0 0.0
    %v1703 = vand.u32 %v1634, 4294901760
    %v1704 = vsub.f32 %v1634, %v1703
    %v1705 = vand.u32 %v1704, 4294901760
    %v1706 = vsub.f32 %v1704, %v1705
    %v1707 = vand.u32 %v1706, 4294901760
    %1708 = vmatmul.mubr.f32.gmra.mrb[0].mxu0 %v1707
    %v1709 = vpop.f32.mrb[0].mxu0
    %v1710 = vadd.f32 0.0, %v1709
    %v1711 = vpop.f32.mrb[0].mxu0
    %v1712 = vadd.f32 0.0, %v1711
    %1713 = vdwg.mxu0
    %v1714 = vand.u32 %v1631, 4294901760
    %v1715 = vsub.f32 %v1631, %v1714
    %v1716 = vand.u32 %v1715, 4294901760
    %v1717 = vsub.f32 %v1715, %v1716
    %v1718 = vand.u32 %v1717, 4294901760
    %1719 = vmatprep.subr.mxu0 %v1718
    %v1720 = vand.u32 %v1630, 4294901760
    %v1721 = vsub.f32 %v1630, %v1720
    %v1722 = vand.u32 %v1721, 4294901760
    %v1723 = vsub.f32 %v1721, %v1722
    %v1724 = vand.u32 %v1723, 4294901760
    %1725 = vmatpush1.msra.mxu0 %v1724
    %1726 = vmatprep.subr.mxu0 0.0
    %1727 = vmatpush1.msra.mxu0 0.0
    %1728 = vmatprep.subr.mxu0 0.0
    %1729 = vmatpush1.msra.mxu0 0.0
    %1730 = vmatprep.subr.mxu0 0.0
    %1731 = vmatpush1.msra.mxu0 0.0
    %1732 = vmatprep.subr.mxu0 0.0
    %1733 = vmatpush1.msra.mxu0 0.0
    %1734 = vmatprep.subr.mxu0 0.0
    %1735 = vmatpush1.msra.mxu0 0.0
    %1736 = vmatprep.subr.mxu0 0.0
    %1737 = vmatpush1.msra.mxu0 0.0
    %1738 = vmatprep.subr.mxu0 0.0
    %1739 = vmatpush1.msra.mxu0 0.0
    %1740 = vmatprep.subr.mxu0 0.0
    %1741 = vmatpush1.msra.mxu0 0.0
    %1742 = vmatprep.subr.mxu0 0.0
    %1743 = vmatpush1.msra.mxu0 0.0
    %1744 = vmatprep.subr.mxu0 0.0
    %1745 = vmatpush1.msra.mxu0 0.0
    %1746 = vmatprep.subr.mxu0 0.0
    %1747 = vmatpush1.msra.mxu0 0.0
    %1748 = vmatprep.subr.mxu0 0.0
    %1749 = vmatpush1.msra.mxu0 0.0
    %1750 = vmatprep.subr.mxu0 0.0
    %1751 = vmatpush1.msra.mxu0 0.0
    %1752 = vmatprep.subr.mxu0 0.0
    %1753 = vmatpush1.msra.mxu0 0.0
    %1754 = vmatprep.subr.mxu0 0.0
    %1755 = vmatpush1.msra.mxu0 0.0
    %1756 = vmatprep.subr.mxu0 0.0
    %1757 = vmatpush1.msra.mxu0 0.0
    %1758 = vmatprep.subr.mxu0 0.0
    %1759 = vmatpush1.msra.mxu0 0.0
    %1760 = vmatprep.subr.mxu0 0.0
    %1761 = vmatpush1.msra.mxu0 0.0
    %1762 = vmatprep.subr.mxu0 0.0
    %1763 = vmatpush1.msra.mxu0 0.0
    %1764 = vmatprep.subr.mxu0 0.0
    %1765 = vmatpush1.msra.mxu0 0.0
    %1766 = vmatprep.subr.mxu0 0.0
    %1767 = vmatpush1.msra.mxu0 0.0
    %1768 = vmatprep.subr.mxu0 0.0
    %1769 = vmatpush1.msra.mxu0 0.0
    %1770 = vmatprep.subr.mxu0 0.0
    %1771 = vmatpush1.msra.mxu0 0.0
    %1772 = vmatprep.subr.mxu0 0.0
    %1773 = vmatpush1.msra.mxu0 0.0
    %1774 = vmatprep.subr.mxu0 0.0
    %1775 = vmatpush1.msra.mxu0 0.0
    %1776 = vmatprep.subr.mxu0 0.0
    %1777 = vmatpush1.msra.mxu0 0.0
    %1778 = vmatprep.subr.mxu0 0.0
    %1779 = vmatpush1.msra.mxu0 0.0
    %1780 = vmatprep.subr.mxu0 0.0
    %1781 = vmatpush1.msra.mxu0 0.0
    %1782 = vmatprep.subr.mxu0 0.0
    %1783 = vmatpush1.msra.mxu0 0.0
    %1784 = vmatprep.subr.mxu0 0.0
    %1785 = vmatpush1.msra.mxu0 0.0
    %1786 = vmatprep.subr.mxu0 0.0
    %1787 = vmatpush1.msra.mxu0 0.0
    %1788 = vmatprep.mubr.f32.mxu0 0.0
    %v1789 = vand.u32 %v1634, 4294901760
    %1790 = vmatmul.mubr.f32.gmra.mrb[0].mxu0 %v1789
    %v1791 = vpop.f32.mrb[0].mxu0
    %v1792 = vadd.f32 %v1710, %v1791
    %v1793 = vpop.f32.mrb[0].mxu0
    %v1794 = vadd.f32 %v1712, %v1793
    %1795 = vdwg.mxu0
    %v1796 = vand.u32 %v1631, 4294901760
    %v1797 = vsub.f32 %v1631, %v1796
    %1798 = vmatprep.subr.mxu0 %v1797
    %v1799 = vand.u32 %v1630, 4294901760
    %v1800 = vsub.f32 %v1630, %v1799
    %1801 = vmatpush1.msra.mxu0 %v1800
    %1802 = vmatprep.subr.mxu0 0.0
    %1803 = vmatpush1.msra.mxu0 0.0
    %1804 = vmatprep.subr.mxu0 0.0
    %1805 = vmatpush1.msra.mxu0 0.0
    %1806 = vmatprep.subr.mxu0 0.0
    %1807 = vmatpush1.msra.mxu0 0.0
    %1808 = vmatprep.subr.mxu0 0.0
    %1809 = vmatpush1.msra.mxu0 0.0
    %1810 = vmatprep.subr.mxu0 0.0
    %1811 = vmatpush1.msra.mxu0 0.0
    %1812 = vmatprep.subr.mxu0 0.0
    %1813 = vmatpush1.msra.mxu0 0.0
    %1814 = vmatprep.subr.mxu0 0.0
    %1815 = vmatpush1.msra.mxu0 0.0
    %1816 = vmatprep.subr.mxu0 0.0
    %1817 = vmatpush1.msra.mxu0 0.0
    %1818 = vmatprep.subr.mxu0 0.0
    %1819 = vmatpush1.msra.mxu0 0.0
    %1820 = vmatprep.subr.mxu0 0.0
    %1821 = vmatpush1.msra.mxu0 0.0
    %1822 = vmatprep.subr.mxu0 0.0
    %1823 = vmatpush1.msra.mxu0 0.0
    %1824 = vmatprep.subr.mxu0 0.0
    %1825 = vmatpush1.msra.mxu0 0.0
    %1826 = vmatprep.subr.mxu0 0.0
    %1827 = vmatpush1.msra.mxu0 0.0
    %1828 = vmatprep.subr.mxu0 0.0
    %1829 = vmatpush1.msra.mxu0 0.0
    %1830 = vmatprep.subr.mxu0 0.0
    %1831 = vmatpush1.msra.mxu0 0.0
    %1832 = vmatprep.subr.mxu0 0.0
    %1833 = vmatpush1.msra.mxu0 0.0
    %1834 = vmatprep.subr.mxu0 0.0
    %1835 = vmatpush1.msra.mxu0 0.0
    %1836 = vmatprep.subr.mxu0 0.0
    %1837 = vmatpush1.msra.mxu0 0.0
    %1838 = vmatprep.subr.mxu0 0.0
    %1839 = vmatpush1.msra.mxu0 0.0
    %1840 = vmatprep.subr.mxu0 0.0
    %1841 = vmatpush1.msra.mxu0 0.0
    %1842 = vmatprep.subr.mxu0 0.0
    %1843 = vmatpush1.msra.mxu0 0.0
    %1844 = vmatprep.subr.mxu0 0.0
    %1845 = vmatpush1.msra.mxu0 0.0
    %1846 = vmatprep.subr.mxu0 0.0
    %1847 = vmatpush1.msra.mxu0 0.0
    %1848 = vmatprep.subr.mxu0 0.0
    %1849 = vmatpush1.msra.mxu0 0.0
    %1850 = vmatprep.subr.mxu0 0.0
    %1851 = vmatpush1.msra.mxu0 0.0
    %1852 = vmatprep.subr.mxu0 0.0
    %1853 = vmatpush1.msra.mxu0 0.0
    %1854 = vmatprep.subr.mxu0 0.0
    %1855 = vmatpush1.msra.mxu0 0.0
    %1856 = vmatprep.subr.mxu0 0.0
    %1857 = vmatpush1.msra.mxu0 0.0
    %1858 = vmatprep.subr.mxu0 0.0
    %1859 = vmatpush1.msra.mxu0 0.0
    %1860 = vmatprep.subr.mxu0 0.0
    %1861 = vmatpush1.msra.mxu0 0.0
    %1862 = vmatprep.subr.mxu0 0.0
    %1863 = vmatpush1.msra.mxu0 0.0
    %1864 = vmatprep.mubr.f32.mxu0 0.0
    %v1865 = vand.u32 %v1634, 4294901760
    %v1866 = vsub.f32 %v1634, %v1865
    %1867 = vmatmul.mubr.f32.gmra.mrb[0].mxu0 %v1866
    %v1868 = vpop.f32.mrb[0].mxu0
    %v1869 = vadd.f32 %v1792, %v1868
    %v1870 = vpop.f32.mrb[0].mxu0
    %v1871 = vadd.f32 %v1794, %v1870
    %1872 = vdwg.mxu0
    %v1873 = vand.u32 %v1631, 4294901760
    %1874 = vmatprep.subr.mxu0 %v1873
    %v1875 = vand.u32 %v1630, 4294901760
    %1876 = vmatpush1.msra.mxu0 %v1875
    %1877 = vmatprep.subr.mxu0 0.0
    %1878 = vmatpush1.msra.mxu0 0.0
    %1879 = vmatprep.subr.mxu0 0.0
    %1880 = vmatpush1.msra.mxu0 0.0
    %1881 = vmatprep.subr.mxu0 0.0
    %1882 = vmatpush1.msra.mxu0 0.0
    %1883 = vmatprep.subr.mxu0 0.0
    %1884 = vmatpush1.msra.mxu0 0.0
    %1885 = vmatprep.subr.mxu0 0.0
    %1886 = vmatpush1.msra.mxu0 0.0
    %1887 = vmatprep.subr.mxu0 0.0
    %1888 = vmatpush1.msra.mxu0 0.0
    %1889 = vmatprep.subr.mxu0 0.0
    %1890 = vmatpush1.msra.mxu0 0.0
    %1891 = vmatprep.subr.mxu0 0.0
    %1892 = vmatpush1.msra.mxu0 0.0
    %1893 = vmatprep.subr.mxu0 0.0
    %1894 = vmatpush1.msra.mxu0 0.0
    %1895 = vmatprep.subr.mxu0 0.0
    %1896 = vmatpush1.msra.mxu0 0.0
    %1897 = vmatprep.subr.mxu0 0.0
    %1898 = vmatpush1.msra.mxu0 0.0
    %1899 = vmatprep.subr.mxu0 0.0
    %1900 = vmatpush1.msra.mxu0 0.0
    %1901 = vmatprep.subr.mxu0 0.0
    %1902 = vmatpush1.msra.mxu0 0.0
    %1903 = vmatprep.subr.mxu0 0.0
    %1904 = vmatpush1.msra.mxu0 0.0
    %1905 = vmatprep.subr.mxu0 0.0
    %1906 = vmatpush1.msra.mxu0 0.0
    %1907 = vmatprep.subr.mxu0 0.0
    %1908 = vmatpush1.msra.mxu0 0.0
    %1909 = vmatprep.subr.mxu0 0.0
    %1910 = vmatpush1.msra.mxu0 0.0
    %1911 = vmatprep.subr.mxu0 0.0
    %1912 = vmatpush1.msra.mxu0 0.0
    %1913 = vmatprep.subr.mxu0 0.0
    %1914 = vmatpush1.msra.mxu0 0.0
    %1915 = vmatprep.subr.mxu0 0.0
    %1916 = vmatpush1.msra.mxu0 0.0
    %1917 = vmatprep.subr.mxu0 0.0
    %1918 = vmatpush1.msra.mxu0 0.0
    %1919 = vmatprep.subr.mxu0 0.0
    %1920 = vmatpush1.msra.mxu0 0.0
    %1921 = vmatprep.subr.mxu0 0.0
    %1922 = vmatpush1.msra.mxu0 0.0
    %1923 = vmatprep.subr.mxu0 0.0
    %1924 = vmatpush1.msra.mxu0 0.0
    %1925 = vmatprep.subr.mxu0 0.0
    %1926 = vmatpush1.msra.mxu0 0.0
    %1927 = vmatprep.subr.mxu0 0.0
    %1928 = vmatpush1.msra.mxu0 0.0
    %1929 = vmatprep.subr.mxu0 0.0
    %1930 = vmatpush1.msra.mxu0 0.0
    %1931 = vmatprep.subr.mxu0 0.0
    %1932 = vmatpush1.msra.mxu0 0.0
    %1933 = vmatprep.subr.mxu0 0.0
    %1934 = vmatpush1.msra.mxu0 0.0
    %1935 = vmatprep.subr.mxu0 0.0
    %1936 = vmatpush1.msra.mxu0 0.0
    %1937 = vmatprep.subr.mxu0 0.0
    %1938 = vmatpush1.msra.mxu0 0.0
    %1939 = vmatprep.mubr.f32.mxu0 0.0
    %v1940 = vand.u32 %v1634, 4294901760
    %v1941 = vsub.f32 %v1634, %v1940
    %v1942 = vand.u32 %v1941, 4294901760
    %1943 = vmatmul.mubr.f32.gmra.mrb[0].mxu0 %v1942
    %v1944 = vpop.f32.mrb[0].mxu0
    %v1945 = vadd.f32 %v1869, %v1944
    %v1946 = vpop.f32.mrb[0].mxu0
    %v1947 = vadd.f32 %v1871, %v1946
    %1948 = vdwg.mxu0
    %v1949 = vand.u32 %v1631, 4294901760
    %v1950 = vsub.f32 %v1631, %v1949
    %v1951 = vand.u32 %v1950, 4294901760
    %1952 = vmatprep.subr.mxu0 %v1951
    %v1953 = vand.u32 %v1630, 4294901760
    %v1954 = vsub.f32 %v1630, %v1953
    %v1955 = vand.u32 %v1954, 4294901760
    %1956 = vmatpush1.msra.mxu0 %v1955
    %1957 = vmatprep.subr.mxu0 0.0
    %1958 = vmatpush1.msra.mxu0 0.0
    %1959 = vmatprep.subr.mxu0 0.0
    %1960 = vmatpush1.msra.mxu0 0.0
    %1961 = vmatprep.subr.mxu0 0.0
    %1962 = vmatpush1.msra.mxu0 0.0
    %1963 = vmatprep.subr.mxu0 0.0
    %1964 = vmatpush1.msra.mxu0 0.0
    %1965 = vmatprep.subr.mxu0 0.0
    %1966 = vmatpush1.msra.mxu0 0.0
    %1967 = vmatprep.subr.mxu0 0.0
    %1968 = vmatpush1.msra.mxu0 0.0
    %1969 = vmatprep.subr.mxu0 0.0
    %1970 = vmatpush1.msra.mxu0 0.0
    %1971 = vmatprep.subr.mxu0 0.0
    %1972 = vmatpush1.msra.mxu0 0.0
    %1973 = vmatprep.subr.mxu0 0.0
    %1974 = vmatpush1.msra.mxu0 0.0
    %1975 = vmatprep.subr.mxu0 0.0
    %1976 = vmatpush1.msra.mxu0 0.0
    %1977 = vmatprep.subr.mxu0 0.0
    %1978 = vmatpush1.msra.mxu0 0.0
    %1979 = vmatprep.subr.mxu0 0.0
    %1980 = vmatpush1.msra.mxu0 0.0
    %1981 = vmatprep.subr.mxu0 0.0
    %1982 = vmatpush1.msra.mxu0 0.0
    %1983 = vmatprep.subr.mxu0 0.0
    %1984 = vmatpush1.msra.mxu0 0.0
    %1985 = vmatprep.subr.mxu0 0.0
    %1986 = vmatpush1.msra.mxu0 0.0
    %1987 = vmatprep.subr.mxu0 0.0
    %1988 = vmatpush1.msra.mxu0 0.0
    %1989 = vmatprep.subr.mxu0 0.0
    %1990 = vmatpush1.msra.mxu0 0.0
    %1991 = vmatprep.subr.mxu0 0.0
    %1992 = vmatpush1.msra.mxu0 0.0
    %1993 = vmatprep.subr.mxu0 0.0
    %1994 = vmatpush1.msra.mxu0 0.0
    %1995 = vmatprep.subr.mxu0 0.0
    %1996 = vmatpush1.msra.mxu0 0.0
    %1997 = vmatprep.subr.mxu0 0.0
    %1998 = vmatpush1.msra.mxu0 0.0
    %1999 = vmatprep.subr.mxu0 0.0
    %2000 = vmatpush1.msra.mxu0 0.0
    %2001 = vmatprep.subr.mxu0 0.0
    %2002 = vmatpush1.msra.mxu0 0.0
    %2003 = vmatprep.subr.mxu0 0.0
    %2004 = vmatpush1.msra.mxu0 0.0
    %2005 = vmatprep.subr.mxu0 0.0
    %2006 = vmatpush1.msra.mxu0 0.0
    %2007 = vmatprep.subr.mxu0 0.0
    %2008 = vmatpush1.msra.mxu0 0.0
    %2009 = vmatprep.subr.mxu0 0.0
    %2010 = vmatpush1.msra.mxu0 0.0
    %2011 = vmatprep.subr.mxu0 0.0
    %2012 = vmatpush1.msra.mxu0 0.0
    %2013 = vmatprep.subr.mxu0 0.0
    %2014 = vmatpush1.msra.mxu0 0.0
    %2015 = vmatprep.subr.mxu0 0.0
    %2016 = vmatpush1.msra.mxu0 0.0
    %2017 = vmatprep.subr.mxu0 0.0
    %2018 = vmatpush1.msra.mxu0 0.0
    %2019 = vmatprep.mubr.f32.mxu0 0.0
    %v2020 = vand.u32 %v1634, 4294901760
    %2021 = vmatmul.mubr.f32.gmra.mrb[0].mxu0 %v2020
    %v2022 = vpop.f32.mrb[0].mxu0
    %v2023 = vadd.f32 %v1945, %v2022
    %v2024 = vpop.f32.mrb[0].mxu0
    %v2025 = vadd.f32 %v1947, %v2024
    %2026 = vdwg.mxu0
    %v2027 = vand.u32 %v1631, 4294901760
    %2028 = vmatprep.subr.mxu0 %v2027
    %v2029 = vand.u32 %v1630, 4294901760
    %2030 = vmatpush1.msra.mxu0 %v2029
    %2031 = vmatprep.subr.mxu0 0.0
    %2032 = vmatpush1.msra.mxu0 0.0
    %2033 = vmatprep.subr.mxu0 0.0
    %2034 = vmatpush1.msra.mxu0 0.0
    %2035 = vmatprep.subr.mxu0 0.0
    %2036 = vmatpush1.msra.mxu0 0.0
    %2037 = vmatprep.subr.mxu0 0.0
    %2038 = vmatpush1.msra.mxu0 0.0
    %2039 = vmatprep.subr.mxu0 0.0
    %2040 = vmatpush1.msra.mxu0 0.0
    %2041 = vmatprep.subr.mxu0 0.0
    %2042 = vmatpush1.msra.mxu0 0.0
    %2043 = vmatprep.subr.mxu0 0.0
    %2044 = vmatpush1.msra.mxu0 0.0
    %2045 = vmatprep.subr.mxu0 0.0
    %2046 = vmatpush1.msra.mxu0 0.0
    %2047 = vmatprep.subr.mxu0 0.0
    %2048 = vmatpush1.msra.mxu0 0.0
    %2049 = vmatprep.subr.mxu0 0.0
    %2050 = vmatpush1.msra.mxu0 0.0
    %2051 = vmatprep.subr.mxu0 0.0
    %2052 = vmatpush1.msra.mxu0 0.0
    %2053 = vmatprep.subr.mxu0 0.0
    %2054 = vmatpush1.msra.mxu0 0.0
    %2055 = vmatprep.subr.mxu0 0.0
    %2056 = vmatpush1.msra.mxu0 0.0
    %2057 = vmatprep.subr.mxu0 0.0
    %2058 = vmatpush1.msra.mxu0 0.0
    %2059 = vmatprep.subr.mxu0 0.0
    %2060 = vmatpush1.msra.mxu0 0.0
    %2061 = vmatprep.subr.mxu0 0.0
    %2062 = vmatpush1.msra.mxu0 0.0
    %2063 = vmatprep.subr.mxu0 0.0
    %2064 = vmatpush1.msra.mxu0 0.0
    %2065 = vmatprep.subr.mxu0 0.0
    %2066 = vmatpush1.msra.mxu0 0.0
    %2067 = vmatprep.subr.mxu0 0.0
    %2068 = vmatpush1.msra.mxu0 0.0
    %2069 = vmatprep.subr.mxu0 0.0
    %2070 = vmatpush1.msra.mxu0 0.0
    %2071 = vmatprep.subr.mxu0 0.0
    %2072 = vmatpush1.msra.mxu0 0.0
    %2073 = vmatprep.subr.mxu0 0.0
    %2074 = vmatpush1.msra.mxu0 0.0
    %2075 = vmatprep.subr.mxu0 0.0
    %2076 = vmatpush1.msra.mxu0 0.0
    %2077 = vmatprep.subr.mxu0 0.0
    %2078 = vmatpush1.msra.mxu0 0.0
    %2079 = vmatprep.subr.mxu0 0.0
    %2080 = vmatpush1.msra.mxu0 0.0
    %2081 = vmatprep.subr.mxu0 0.0
    %2082 = vmatpush1.msra.mxu0 0.0
    %2083 = vmatprep.subr.mxu0 0.0
    %2084 = vmatpush1.msra.mxu0 0.0
    %2085 = vmatprep.subr.mxu0 0.0
    %2086 = vmatpush1.msra.mxu0 0.0
    %2087 = vmatprep.subr.mxu0 0.0
    %2088 = vmatpush1.msra.mxu0 0.0
    %2089 = vmatprep.subr.mxu0 0.0
    %2090 = vmatpush1.msra.mxu0 0.0
    %2091 = vmatprep.subr.mxu0 0.0
    %2092 = vmatpush1.msra.mxu0 0.0
    %2093 = vmatprep.mubr.f32.mxu0 0.0
    %v2094 = vand.u32 %v1634, 4294901760
    %2095 = vmatmul.mubr.f32.gmra.mrb[0].mxu0 %v2094
    %v2096 = vpop.f32.mrb[0].mxu0
    %v2097 = vadd.f32 %v2023, %v2096
    %v2098 = vpop.f32.mrb[0].mxu0
    %v2099 = vadd.f32 %v2025, %v2098
    %2100 = vdwg.mxu0
    %v2101 = vmul.f32 %v1630, %v1630
    %v2102 = vmul.f32 %v1631, %v1631
    %v2103 = vand.u32 %v2102, 4294901760
    %2104 = vmatprep.subr.mxu0 %v2103
    %v2105 = vand.u32 %v2101, 4294901760
    %2106 = vmatpush1.msra.mxu0 %v2105
    %2107 = vmatprep.subr.mxu0 0.0
    %2108 = vmatpush1.msra.mxu0 0.0
    %2109 = vmatprep.subr.mxu0 0.0
    %2110 = vmatpush1.msra.mxu0 0.0
    %2111 = vmatprep.subr.mxu0 0.0
    %2112 = vmatpush1.msra.mxu0 0.0
    %2113 = vmatprep.subr.mxu0 0.0
    %2114 = vmatpush1.msra.mxu0 0.0
    %2115 = vmatprep.subr.mxu0 0.0
    %2116 = vmatpush1.msra.mxu0 0.0
    %2117 = vmatprep.subr.mxu0 0.0
    %2118 = vmatpush1.msra.mxu0 0.0
    %2119 = vmatprep.subr.mxu0 0.0
    %2120 = vmatpush1.msra.mxu0 0.0
    %2121 = vmatprep.subr.mxu0 0.0
    %2122 = vmatpush1.msra.mxu0 0.0
    %2123 = vmatprep.subr.mxu0 0.0
    %2124 = vmatpush1.msra.mxu0 0.0
    %2125 = vmatprep.subr.mxu0 0.0
    %2126 = vmatpush1.msra.mxu0 0.0
    %2127 = vmatprep.subr.mxu0 0.0
    %2128 = vmatpush1.msra.mxu0 0.0
    %2129 = vmatprep.subr.mxu0 0.0
    %2130 = vmatpush1.msra.mxu0 0.0
    %2131 = vmatprep.subr.mxu0 0.0
    %2132 = vmatpush1.msra.mxu0 0.0
    %2133 = vmatprep.subr.mxu0 0.0
    %2134 = vmatpush1.msra.mxu0 0.0
    %2135 = vmatprep.subr.mxu0 0.0
    %2136 = vmatpush1.msra.mxu0 0.0
    %2137 = vmatprep.subr.mxu0 0.0
    %2138 = vmatpush1.msra.mxu0 0.0
    %2139 = vmatprep.subr.mxu0 0.0
    %2140 = vmatpush1.msra.mxu0 0.0
    %2141 = vmatprep.subr.mxu0 0.0
    %2142 = vmatpush1.msra.mxu0 0.0
    %2143 = vmatprep.subr.mxu0 0.0
    %2144 = vmatpush1.msra.mxu0 0.0
    %2145 = vmatprep.subr.mxu0 0.0
    %2146 = vmatpush1.msra.mxu0 0.0
    %2147 = vmatprep.subr.mxu0 0.0
    %2148 = vmatpush1.msra.mxu0 0.0
    %2149 = vmatprep.subr.mxu0 0.0
    %2150 = vmatpush1.msra.mxu0 0.0
    %2151 = vmatprep.subr.mxu0 0.0
    %2152 = vmatpush1.msra.mxu0 0.0
    %2153 = vmatprep.subr.mxu0 0.0
    %2154 = vmatpush1.msra.mxu0 0.0
    %2155 = vmatprep.subr.mxu0 0.0
    %2156 = vmatpush1.msra.mxu0 0.0
    %2157 = vmatprep.subr.mxu0 0.0
    %2158 = vmatpush1.msra.mxu0 0.0
    %2159 = vmatprep.subr.mxu0 0.0
    %2160 = vmatpush1.msra.mxu0 0.0
    %2161 = vmatprep.subr.mxu0 0.0
    %2162 = vmatpush1.msra.mxu0 0.0
    %2163 = vmatprep.subr.mxu0 0.0
    %2164 = vmatpush1.msra.mxu0 0.0
    %2165 = vmatprep.subr.mxu0 0.0
    %2166 = vmatpush1.msra.mxu0 0.0
    %2167 = vmatprep.subr.mxu0 0.0
    %2168 = vmatpush1.msra.mxu0 0.0
    %2169 = vmatprep.mubr.f32.mxu0 0.0
    %v2170 = vand.u32 %v1634, 4294901760
    %v2171 = vsub.f32 %v1634, %v2170
    %v2172 = vand.u32 %v2171, 4294901760
    %v2173 = vsub.f32 %v2171, %v2172
    %v2174 = vand.u32 %v2173, 4294901760
    %2175 = vmatmul.mubr.f32.gmra.mrb[0].mxu0 %v2174
    %v2176 = vpop.f32.mrb[0].mxu0
    %v2177 = vadd.f32 0.0, %v2176
    %v2178 = vpop.f32.mrb[0].mxu0
    %v2179 = vadd.f32 0.0, %v2178
    %2180 = vdwg.mxu0
    %v2181 = vand.u32 %v2102, 4294901760
    %v2182 = vsub.f32 %v2102, %v2181
    %v2183 = vand.u32 %v2182, 4294901760
    %v2184 = vsub.f32 %v2182, %v2183
    %v2185 = vand.u32 %v2184, 4294901760
    %2186 = vmatprep.subr.mxu0 %v2185
    %v2187 = vand.u32 %v2101, 4294901760
    %v2188 = vsub.f32 %v2101, %v2187
    %v2189 = vand.u32 %v2188, 4294901760
    %v2190 = vsub.f32 %v2188, %v2189
    %v2191 = vand.u32 %v2190, 4294901760
    %2192 = vmatpush1.msra.mxu0 %v2191
    %2193 = vmatprep.subr.mxu0 0.0
    %2194 = vmatpush1.msra.mxu0 0.0
    %2195 = vmatprep.subr.mxu0 0.0
    %2196 = vmatpush1.msra.mxu0 0.0
    %2197 = vmatprep.subr.mxu0 0.0
    %2198 = vmatpush1.msra.mxu0 0.0
    %2199 = vmatprep.subr.mxu0 0.0
    %2200 = vmatpush1.msra.mxu0 0.0
    %2201 = vmatprep.subr.mxu0 0.0
    %2202 = vmatpush1.msra.mxu0 0.0
    %2203 = vmatprep.subr.mxu0 0.0
    %2204 = vmatpush1.msra.mxu0 0.0
    %2205 = vmatprep.subr.mxu0 0.0
    %2206 = vmatpush1.msra.mxu0 0.0
    %2207 = vmatprep.subr.mxu0 0.0
    %2208 = vmatpush1.msra.mxu0 0.0
    %2209 = vmatprep.subr.mxu0 0.0
    %2210 = vmatpush1.msra.mxu0 0.0
    %2211 = vmatprep.subr.mxu0 0.0
    %2212 = vmatpush1.msra.mxu0 0.0
    %2213 = vmatprep.subr.mxu0 0.0
    %2214 = vmatpush1.msra.mxu0 0.0
    %2215 = vmatprep.subr.mxu0 0.0
    %2216 = vmatpush1.msra.mxu0 0.0
    %2217 = vmatprep.subr.mxu0 0.0
    %2218 = vmatpush1.msra.mxu0 0.0
    %2219 = vmatprep.subr.mxu0 0.0
    %2220 = vmatpush1.msra.mxu0 0.0
    %2221 = vmatprep.subr.mxu0 0.0
    %2222 = vmatpush1.msra.mxu0 0.0
    %2223 = vmatprep.subr.mxu0 0.0
    %2224 = vmatpush1.msra.mxu0 0.0
    %2225 = vmatprep.subr.mxu0 0.0
    %2226 = vmatpush1.msra.mxu0 0.0
    %2227 = vmatprep.subr.mxu0 0.0
    %2228 = vmatpush1.msra.mxu0 0.0
    %2229 = vmatprep.subr.mxu0 0.0
    %2230 = vmatpush1.msra.mxu0 0.0
    %2231 = vmatprep.subr.mxu0 0.0
    %2232 = vmatpush1.msra.mxu0 0.0
    %2233 = vmatprep.subr.mxu0 0.0
    %2234 = vmatpush1.msra.mxu0 0.0
    %2235 = vmatprep.subr.mxu0 0.0
    %2236 = vmatpush1.msra.mxu0 0.0
    %2237 = vmatprep.subr.mxu0 0.0
    %2238 = vmatpush1.msra.mxu0 0.0
    %2239 = vmatprep.subr.mxu0 0.0
    %2240 = vmatpush1.msra.mxu0 0.0
    %2241 = vmatprep.subr.mxu0 0.0
    %2242 = vmatpush1.msra.mxu0 0.0
    %2243 = vmatprep.subr.mxu0 0.0
    %2244 = vmatpush1.msra.mxu0 0.0
    %2245 = vmatprep.subr.mxu0 0.0
    %2246 = vmatpush1.msra.mxu0 0.0
    %2247 = vmatprep.subr.mxu0 0.0
    %2248 = vmatpush1.msra.mxu0 0.0
    %2249 = vmatprep.subr.mxu0 0.0
    %2250 = vmatpush1.msra.mxu0 0.0
    %2251 = vmatprep.subr.mxu0 0.0
    %2252 = vmatpush1.msra.mxu0 0.0
    %2253 = vmatprep.subr.mxu0 0.0
    %2254 = vmatpush1.msra.mxu0 0.0
    %2255 = vmatprep.mubr.f32.mxu0 0.0
    %v2256 = vand.u32 %v1634, 4294901760
    %2257 = vmatmul.mubr.f32.gmra.mrb[0].mxu0 %v2256
    %v2258 = vpop.f32.mrb[0].mxu0
    %v2259 = vadd.f32 %v2177, %v2258
    %v2260 = vpop.f32.mrb[0].mxu0
    %v2261 = vadd.f32 %v2179, %v2260
    %2262 = vdwg.mxu0
    %v2263 = vand.u32 %v2102, 4294901760
    %v2264 = vsub.f32 %v2102, %v2263
    %2265 = vmatprep.subr.mxu0 %v2264
    %v2266 = vand.u32 %v2101, 4294901760
    %v2267 = vsub.f32 %v2101, %v2266
    %2268 = vmatpush1.msra.mxu0 %v2267
    %2269 = vmatprep.subr.mxu0 0.0
    %2270 = vmatpush1.msra.mxu0 0.0
    %2271 = vmatprep.subr.mxu0 0.0
    %2272 = vmatpush1.msra.mxu0 0.0
    %2273 = vmatprep.subr.mxu0 0.0
    %2274 = vmatpush1.msra.mxu0 0.0
    %2275 = vmatprep.subr.mxu0 0.0
    %2276 = vmatpush1.msra.mxu0 0.0
    %2277 = vmatprep.subr.mxu0 0.0
    %2278 = vmatpush1.msra.mxu0 0.0
    %2279 = vmatprep.subr.mxu0 0.0
    %2280 = vmatpush1.msra.mxu0 0.0
    %2281 = vmatprep.subr.mxu0 0.0
    %2282 = vmatpush1.msra.mxu0 0.0
    %2283 = vmatprep.subr.mxu0 0.0
    %2284 = vmatpush1.msra.mxu0 0.0
    %2285 = vmatprep.subr.mxu0 0.0
    %2286 = vmatpush1.msra.mxu0 0.0
    %2287 = vmatprep.subr.mxu0 0.0
    %2288 = vmatpush1.msra.mxu0 0.0
    %2289 = vmatprep.subr.mxu0 0.0
    %2290 = vmatpush1.msra.mxu0 0.0
    %2291 = vmatprep.subr.mxu0 0.0
    %2292 = vmatpush1.msra.mxu0 0.0
    %2293 = vmatprep.subr.mxu0 0.0
    %2294 = vmatpush1.msra.mxu0 0.0
    %2295 = vmatprep.subr.mxu0 0.0
    %2296 = vmatpush1.msra.mxu0 0.0
    %2297 = vmatprep.subr.mxu0 0.0
    %2298 = vmatpush1.msra.mxu0 0.0
    %2299 = vmatprep.subr.mxu0 0.0
    %2300 = vmatpush1.msra.mxu0 0.0
    %2301 = vmatprep.subr.mxu0 0.0
    %2302 = vmatpush1.msra.mxu0 0.0
    %2303 = vmatprep.subr.mxu0 0.0
    %2304 = vmatpush1.msra.mxu0 0.0
    %2305 = vmatprep.subr.mxu0 0.0
    %2306 = vmatpush1.msra.mxu0 0.0
    %2307 = vmatprep.subr.mxu0 0.0
    %2308 = vmatpush1.msra.mxu0 0.0
    %2309 = vmatprep.subr.mxu0 0.0
    %2310 = vmatpush1.msra.mxu0 0.0
    %2311 = vmatprep.subr.mxu0 0.0
    %2312 = vmatpush1.msra.mxu0 0.0
    %2313 = vmatprep.subr.mxu0 0.0
    %2314 = vmatpush1.msra.mxu0 0.0
    %2315 = vmatprep.subr.mxu0 0.0
    %2316 = vmatpush1.msra.mxu0 0.0
    %2317 = vmatprep.subr.mxu0 0.0
    %2318 = vmatpush1.msra.mxu0 0.0
    %2319 = vmatprep.subr.mxu0 0.0
    %2320 = vmatpush1.msra.mxu0 0.0
    %2321 = vmatprep.subr.mxu0 0.0
    %2322 = vmatpush1.msra.mxu0 0.0
    %2323 = vmatprep.subr.mxu0 0.0
    %2324 = vmatpush1.msra.mxu0 0.0
    %2325 = vmatprep.subr.mxu0 0.0
    %2326 = vmatpush1.msra.mxu0 0.0
    %2327 = vmatprep.subr.mxu0 0.0
    %2328 = vmatpush1.msra.mxu0 0.0
    %2329 = vmatprep.subr.mxu0 0.0
    %2330 = vmatpush1.msra.mxu0 0.0
    %2331 = vmatprep.mubr.f32.mxu0 0.0
    %v2332 = vand.u32 %v1634, 4294901760
    %v2333 = vsub.f32 %v1634, %v2332
    %2334 = vmatmul.mubr.f32.gmra.mrb[0].mxu0 %v2333
    %v2335 = vpop.f32.mrb[0].mxu0
    %v2336 = vadd.f32 %v2259, %v2335
    %v2337 = vpop.f32.mrb[0].mxu0
    %v2338 = vadd.f32 %v2261, %v2337
    %2339 = vdwg.mxu0
    %v2340 = vand.u32 %v2102, 4294901760
    %2341 = vmatprep.subr.mxu0 %v2340
    %v2342 = vand.u32 %v2101, 4294901760
    %2343 = vmatpush1.msra.mxu0 %v2342
    %2344 = vmatprep.subr.mxu0 0.0
    %2345 = vmatpush1.msra.mxu0 0.0
    %2346 = vmatprep.subr.mxu0 0.0
    %2347 = vmatpush1.msra.mxu0 0.0
    %2348 = vmatprep.subr.mxu0 0.0
    %2349 = vmatpush1.msra.mxu0 0.0
    %2350 = vmatprep.subr.mxu0 0.0
    %2351 = vmatpush1.msra.mxu0 0.0
    %2352 = vmatprep.subr.mxu0 0.0
    %2353 = vmatpush1.msra.mxu0 0.0
    %2354 = vmatprep.subr.mxu0 0.0
    %2355 = vmatpush1.msra.mxu0 0.0
    %2356 = vmatprep.subr.mxu0 0.0
    %2357 = vmatpush1.msra.mxu0 0.0
    %2358 = vmatprep.subr.mxu0 0.0
    %2359 = vmatpush1.msra.mxu0 0.0
    %2360 = vmatprep.subr.mxu0 0.0
    %2361 = vmatpush1.msra.mxu0 0.0
    %2362 = vmatprep.subr.mxu0 0.0
    %2363 = vmatpush1.msra.mxu0 0.0
    %2364 = vmatprep.subr.mxu0 0.0
    %2365 = vmatpush1.msra.mxu0 0.0
    %2366 = vmatprep.subr.mxu0 0.0
    %2367 = vmatpush1.msra.mxu0 0.0
    %2368 = vmatprep.subr.mxu0 0.0
    %2369 = vmatpush1.msra.mxu0 0.0
    %2370 = vmatprep.subr.mxu0 0.0
    %2371 = vmatpush1.msra.mxu0 0.0
    %2372 = vmatprep.subr.mxu0 0.0
    %2373 = vmatpush1.msra.mxu0 0.0
    %2374 = vmatprep.subr.mxu0 0.0
    %2375 = vmatpush1.msra.mxu0 0.0
    %2376 = vmatprep.subr.mxu0 0.0
    %2377 = vmatpush1.msra.mxu0 0.0
    %2378 = vmatprep.subr.mxu0 0.0
    %2379 = vmatpush1.msra.mxu0 0.0
    %2380 = vmatprep.subr.mxu0 0.0
    %2381 = vmatpush1.msra.mxu0 0.0
    %2382 = vmatprep.subr.mxu0 0.0
    %2383 = vmatpush1.msra.mxu0 0.0
    %2384 = vmatprep.subr.mxu0 0.0
    %2385 = vmatpush1.msra.mxu0 0.0
    %2386 = vmatprep.subr.mxu0 0.0
    %2387 = vmatpush1.msra.mxu0 0.0
    %2388 = vmatprep.subr.mxu0 0.0
    %2389 = vmatpush1.msra.mxu0 0.0
    %2390 = vmatprep.subr.mxu0 0.0
    %2391 = vmatpush1.msra.mxu0 0.0
    %2392 = vmatprep.subr.mxu0 0.0
    %2393 = vmatpush1.msra.mxu0 0.0
    %2394 = vmatprep.subr.mxu0 0.0
    %2395 = vmatpush1.msra.mxu0 0.0
    %2396 = vmatprep.subr.mxu0 0.0
    %2397 = vmatpush1.msra.mxu0 0.0
    %2398 = vmatprep.subr.mxu0 0.0
    %2399 = vmatpush1.msra.mxu0 0.0
    %2400 = vmatprep.subr.mxu0 0.0
    %2401 = vmatpush1.msra.mxu0 0.0
    %2402 = vmatprep.subr.mxu0 0.0
    %2403 = vmatpush1.msra.mxu0 0.0
    %2404 = vmatprep.subr.mxu0 0.0
    %2405 = vmatpush1.msra.mxu0 0.0
    %2406 = vmatprep.mubr.f32.mxu0 0.0
    %v2407 = vand.u32 %v1634, 4294901760
    %v2408 = vsub.f32 %v1634, %v2407
    %v2409 = vand.u32 %v2408, 4294901760
    %2410 = vmatmul.mubr.f32.gmra.mrb[0].mxu0 %v2409
    %v2411 = vpop.f32.mrb[0].mxu0
    %v2412 = vadd.f32 %v2336, %v2411
    %v2413 = vpop.f32.mrb[0].mxu0
    %v2414 = vadd.f32 %v2338, %v2413
    %2415 = vdwg.mxu0
    %v2416 = vand.u32 %v2102, 4294901760
    %v2417 = vsub.f32 %v2102, %v2416
    %v2418 = vand.u32 %v2417, 4294901760
    %2419 = vmatprep.subr.mxu0 %v2418
    %v2420 = vand.u32 %v2101, 4294901760
    %v2421 = vsub.f32 %v2101, %v2420
    %v2422 = vand.u32 %v2421, 4294901760
    %2423 = vmatpush1.msra.mxu0 %v2422
    %2424 = vmatprep.subr.mxu0 0.0
    %2425 = vmatpush1.msra.mxu0 0.0
    %2426 = vmatprep.subr.mxu0 0.0
    %2427 = vmatpush1.msra.mxu0 0.0
    %2428 = vmatprep.subr.mxu0 0.0
    %2429 = vmatpush1.msra.mxu0 0.0
    %2430 = vmatprep.subr.mxu0 0.0
    %2431 = vmatpush1.msra.mxu0 0.0
    %2432 = vmatprep.subr.mxu0 0.0
    %2433 = vmatpush1.msra.mxu0 0.0
    %2434 = vmatprep.subr.mxu0 0.0
    %2435 = vmatpush1.msra.mxu0 0.0
    %2436 = vmatprep.subr.mxu0 0.0
    %2437 = vmatpush1.msra.mxu0 0.0
    %2438 = vmatprep.subr.mxu0 0.0
    %2439 = vmatpush1.msra.mxu0 0.0
    %2440 = vmatprep.subr.mxu0 0.0
    %2441 = vmatpush1.msra.mxu0 0.0
    %2442 = vmatprep.subr.mxu0 0.0
    %2443 = vmatpush1.msra.mxu0 0.0
    %2444 = vmatprep.subr.mxu0 0.0
    %2445 = vmatpush1.msra.mxu0 0.0
    %2446 = vmatprep.subr.mxu0 0.0
    %2447 = vmatpush1.msra.mxu0 0.0
    %2448 = vmatprep.subr.mxu0 0.0
    %2449 = vmatpush1.msra.mxu0 0.0
    %2450 = vmatprep.subr.mxu0 0.0
    %2451 = vmatpush1.msra.mxu0 0.0
    %2452 = vmatprep.subr.mxu0 0.0
    %2453 = vmatpush1.msra.mxu0 0.0
    %2454 = vmatprep.subr.mxu0 0.0
    %2455 = vmatpush1.msra.mxu0 0.0
    %2456 = vmatprep.subr.mxu0 0.0
    %2457 = vmatpush1.msra.mxu0 0.0
    %2458 = vmatprep.subr.mxu0 0.0
    %2459 = vmatpush1.msra.mxu0 0.0
    %2460 = vmatprep.subr.mxu0 0.0
    %2461 = vmatpush1.msra.mxu0 0.0
    %2462 = vmatprep.subr.mxu0 0.0
    %2463 = vmatpush1.msra.mxu0 0.0
    %2464 = vmatprep.subr.mxu0 0.0
    %2465 = vmatpush1.msra.mxu0 0.0
    %2466 = vmatprep.subr.mxu0 0.0
    %2467 = vmatpush1.msra.mxu0 0.0
    %2468 = vmatprep.subr.mxu0 0.0
    %2469 = vmatpush1.msra.mxu0 0.0
    %2470 = vmatprep.subr.mxu0 0.0
    %2471 = vmatpush1.msra.mxu0 0.0
    %2472 = vmatprep.subr.mxu0 0.0
    %2473 = vmatpush1.msra.mxu0 0.0
    %2474 = vmatprep.subr.mxu0 0.0
    %2475 = vmatpush1.msra.mxu0 0.0
    %2476 = vmatprep.subr.mxu0 0.0
    %2477 = vmatpush1.msra.mxu0 0.0
    %2478 = vmatprep.subr.mxu0 0.0
    %2479 = vmatpush1.msra.mxu0 0.0
    %2480 = vmatprep.subr.mxu0 0.0
    %2481 = vmatpush1.msra.mxu0 0.0
    %2482 = vmatprep.subr.mxu0 0.0
    %2483 = vmatpush1.msra.mxu0 0.0
    %2484 = vmatprep.subr.mxu0 0.0
    %2485 = vmatpush1.msra.mxu0 0.0
    %2486 = vmatprep.mubr.f32.mxu0 0.0
    %v2487 = vand.u32 %v1634, 4294901760
    %2488 = vmatmul.mubr.f32.gmra.mrb[0].mxu0 %v2487
    %v2489 = vpop.f32.mrb[0].mxu0
    %v2490 = vadd.f32 %v2412, %v2489
    %v2491 = vpop.f32.mrb[0].mxu0
    %v2492 = vadd.f32 %v2414, %v2491
    %2493 = vdwg.mxu0
    %v2494 = vand.u32 %v2102, 4294901760
    %2495 = vmatprep.subr.mxu0 %v2494
    %v2496 = vand.u32 %v2101, 4294901760
    %2497 = vmatpush1.msra.mxu0 %v2496
    %2498 = vmatprep.subr.mxu0 0.0
    %2499 = vmatpush1.msra.mxu0 0.0
    %2500 = vmatprep.subr.mxu0 0.0
    %2501 = vmatpush1.msra.mxu0 0.0
    %2502 = vmatprep.subr.mxu0 0.0
    %2503 = vmatpush1.msra.mxu0 0.0
    %2504 = vmatprep.subr.mxu0 0.0
    %2505 = vmatpush1.msra.mxu0 0.0
    %2506 = vmatprep.subr.mxu0 0.0
    %2507 = vmatpush1.msra.mxu0 0.0
    %2508 = vmatprep.subr.mxu0 0.0
    %2509 = vmatpush1.msra.mxu0 0.0
    %2510 = vmatprep.subr.mxu0 0.0
    %2511 = vmatpush1.msra.mxu0 0.0
    %2512 = vmatprep.subr.mxu0 0.0
    %2513 = vmatpush1.msra.mxu0 0.0
    %2514 = vmatprep.subr.mxu0 0.0
    %2515 = vmatpush1.msra.mxu0 0.0
    %2516 = vmatprep.subr.mxu0 0.0
    %2517 = vmatpush1.msra.mxu0 0.0
    %2518 = vmatprep.subr.mxu0 0.0
    %2519 = vmatpush1.msra.mxu0 0.0
    %2520 = vmatprep.subr.mxu0 0.0
    %2521 = vmatpush1.msra.mxu0 0.0
    %2522 = vmatprep.subr.mxu0 0.0
    %2523 = vmatpush1.msra.mxu0 0.0
    %2524 = vmatprep.subr.mxu0 0.0
    %2525 = vmatpush1.msra.mxu0 0.0
    %2526 = vmatprep.subr.mxu0 0.0
    %2527 = vmatpush1.msra.mxu0 0.0
    %2528 = vmatprep.subr.mxu0 0.0
    %2529 = vmatpush1.msra.mxu0 0.0
    %2530 = vmatprep.subr.mxu0 0.0
    %2531 = vmatpush1.msra.mxu0 0.0
    %2532 = vmatprep.subr.mxu0 0.0
    %2533 = vmatpush1.msra.mxu0 0.0
    %2534 = vmatprep.subr.mxu0 0.0
    %2535 = vmatpush1.msra.mxu0 0.0
    %2536 = vmatprep.subr.mxu0 0.0
    %2537 = vmatpush1.msra.mxu0 0.0
    %2538 = vmatprep.subr.mxu0 0.0
    %2539 = vmatpush1.msra.mxu0 0.0
    %2540 = vmatprep.subr.mxu0 0.0
    %2541 = vmatpush1.msra.mxu0 0.0
    %2542 = vmatprep.subr.mxu0 0.0
    %2543 = vmatpush1.msra.mxu0 0.0
    %2544 = vmatprep.subr.mxu0 0.0
    %2545 = vmatpush1.msra.mxu0 0.0
    %2546 = vmatprep.subr.mxu0 0.0
    %2547 = vmatpush1.msra.mxu0 0.0
    %2548 = vmatprep.subr.mxu0 0.0
    %2549 = vmatpush1.msra.mxu0 0.0
    %2550 = vmatprep.subr.mxu0 0.0
    %2551 = vmatpush1.msra.mxu0 0.0
    %2552 = vmatprep.subr.mxu0 0.0
    %2553 = vmatpush1.msra.mxu0 0.0
    %2554 = vmatprep.subr.mxu0 0.0
    %2555 = vmatpush1.msra.mxu0 0.0
    %2556 = vmatprep.subr.mxu0 0.0
    %2557 = vmatpush1.msra.mxu0 0.0
    %2558 = vmatprep.subr.mxu0 0.0
    %2559 = vmatpush1.msra.mxu0 0.0
    %2560 = vmatprep.mubr.f32.mxu0 0.0
    %v2561 = vand.u32 %v1634, 4294901760
    %2562 = vmatmul.mubr.f32.gmra.mrb[0].mxu0 %v2561
    %v2563 = vpop.f32.mrb[0].mxu0
    %v2564 = vadd.f32 %v2490, %v2563
    %v2565 = vpop.f32.mrb[0].mxu0
    %v2566 = vadd.f32 %v2492, %v2565
    %2567 = vdwg.mxu0
    %v2568 = vadd.f32 %v2097, %v2099
    %2569 = vadd.xlane.f32.xlu0 %v2568
    %v2570 = vpop.xlane.xlu0 %2569
    %v2571 = vadd.f32 %v2564, %v2566
    %2572 = vadd.xlane.f32.xlu0 %v2571
    %v2573 = vpop.xlane.xlu0 %2572
    %v2574 = vmul.f32 %v2570, %v2570
    %v2575 = vsub.f32 %v2573, %v2574
    %v2576 = vadd.f32 %v2575, 1e-05
    %v2577 = vrsqrt.pop %v2576
    %v2578 = vmul.f32 %v39, %v2577
    %v2579 = vmul.f32 %v2570, %v2578
    %2581 = vrot.lane.b32.xlu0 %v2579, 1
    %v2582 = vpop.permute.xlu0 %2581
    %v2584 = vsub.f32 %v39, %v2582
    %2586 = vset.pattern.permute.xlu0 59
    %2587 = vperm.xlu0 %2586, %v2578
    %v2588 = vpop.permute.xlu0 %2587
    %v2590 = vmul.f32 %v1630, %v2588
    %v2591 = vmul.f32 %v1631, %v2588
    %2593 = vset.pattern.permute.xlu0 60
    %2594 = vperm.xlu0 %2593, %v2584
    %v2595 = vpop.permute.xlu0 %2594
    %v2597 = vadd.f32 %v2590, %v2595
    %v2598 = vadd.f32 %v2591, %v2595
    %v2599 = vmax.f32 %v2597, 0.0
    %v2600 = vmax.f32 %v2598, 0.0
    %2601 = vst [vmem:[#allocation7] sm:$0xff] %v2599
    %2602 = vst [vmem:[#allocation7 + $0x8] sm:$0xff] %v2600
    // Predicated region
    $region18: #{tpu_custom_call.1} parent=1 // pred_check
      _
    $region19: #{tpu_custom_call.1} parent=1 // pred_check_branch
      %2604 = sbr.rel (0) target = $region21
    $region20: #{tpu_custom_call.1} parent=1 // pred_region
      %s2606 = ssub.s32 256, 256
      %2607 = vsyncadd [#allocation4], %s2606
      %s2609 = sshll.u32 [#allocation7], 4
      %s2610 = int_to_ptr.vmem [resolvable:$true] %s2609
      %2612 = dma.vmem_to_hbm [thread:$0]  %s2610, 256, %s2, [#allocation4]
    $region21: #{tpu_custom_call.1} parent=1 // pred_fallthru
      _
    // Predicated region
    $region22: #{tpu_custom_call.1} parent=1 // pred_check
      _
    $region23: #{tpu_custom_call.1} parent=1 // pred_check_branch
      %2614 = sbr.rel (0) target = $region25
    $region24: #{tpu_custom_call.1} parent=1 // pred_region
      %2615 = dma.done [#allocation4], 256
    $region25: #{tpu_custom_call.1} parent=1 // pred_fallthru
      _
    %2616 = vsyncpa [#allocation3], 1
    %2617 = vsyncpa [#allocation6], 1
    %2618 = vsyncpa [#allocation4], 1

</llo_original>
